<compile_context>
chip_gen: v6e
topology: v6e:2x2x1
jax: 0.10.0
libtpu: 0.0.40
codegen_flags: <defaults>
</compile_context>

<pallas_src>
import functools

import jax
import jax.numpy as jnp
from jax.experimental import pallas as pl
from jax.experimental.pallas import tpu as pltpu

F32 = jnp.float32
VMEM = pltpu.MemorySpace.VMEM
SMEM = pltpu.MemorySpace.SMEM
LANES = 256  # slab width: max output dim of any packed weight


def _vmem():
    return pl.BlockSpec(memory_space=VMEM)


def _smem():
    return pl.BlockSpec(memory_space=SMEM)


# ----------------------------------------------------------------------------
# The single fused forward kernel.
#   inputs : cw (SMEM [S,3]), mix (SMEM [S]), slab (VMEM), img, ph, aff_packed, eps (VMEM)
#   outputs: logits [N, ncls] (VMEM), graph_loss [1] (SMEM)
# ----------------------------------------------------------------------------
def _fused_forward_kernel(layout, cfg,
                          cw_ref, mix_ref, slab_ref, img_ref, ph_ref, aff_ref, eps_ref,
                          out_ref, loss_ref):
    N, S, nd, out = cfg["N"], cfg["S"], cfg["nd"], cfg["out"]

    def W(name):  # static carve-out of one packed weight from the slab
        off, (r, c) = layout[name]
        return slab_ref[off:off + r, :c]

    # ---------------- VAE encoder (mu|logvar as one batched linear) ----------------
    x = ph_ref[...]
    h = jnp.maximum(jnp.dot(x, W("vae_e1_w"), preferred_element_type=F32) + W("vae_e1_b"), 0.0)
    mu_lv = jnp.dot(h, W("vae_e2_w"), preferred_element_type=F32) + W("vae_e2_b")
    mu, logvar = mu_lv[:, :nd], mu_lv[:, nd:]
    ph_z = mu + eps_ref[...] * jnp.exp(0.5 * logvar)

    # ---------------- RP attention (per-score 1x1 conv + sigmoid + weighted sum) ----
    rp = jnp.zeros((N, N), F32)
    value = jnp.zeros((), F32)
    for s in range(S):  # S is tiny -> static unroll
        g0 = aff_ref[:, (s * 3 + 0) * N:(s * 3 + 1) * N]
        g1 = aff_ref[:, (s * 3 + 1) * N:(s * 3 + 2) * N]
        g2 = aff_ref[:, (s * 3 + 2) * N:(s * 3 + 3) * N]
        w0 = cw_ref[s, 0]
        w1 = cw_ref[s, 1]
        w2 = cw_ref[s, 2]
        conv = w0 * g0 + w1 * g1 + w2 * g2
        rp = rp + mix_ref[s] * jax.nn.sigmoid(conv)
        # reward/penalty value (reference uses only reward*g0 + penalty*g1)
        value = value + jnp.sum(jnp.maximum(w0 * g0 + w1 * g1, 0.0))
    value = value / float(N * N)

    # ---------------- cosine similarity of fused_embed = cat([img, ph_z]) -----------
    # TODO(synk): cal_feature_sim source not provided; cosine-similarity stand-in.
    fused = jnp.concatenate([img_ref[...], ph_z], axis=-1)            # (N, 2*nd)
    inv = 1.0 / (jnp.sqrt(jnp.sum(fused * fused, axis=-1, keepdims=True)) + 1e-8)
    fn = fused * inv
    dims = (((1,), (1,)), ((), ()))                                   # A @ A.T, no transpose
    sim = jax.lax.dot_general(fn, fn, dims, preferred_element_type=F32)
    G = sim * rp                                                      # fused_graph

    rowsum = jnp.sum(G, axis=-1, keepdims=True)
    # degree loss: matches reference torch.mm(G, ones + 1e-5).log() -> log(rowsum*(1+1e-5)).
    # NOTE: like the reference, NaN/-inf if a row-sum is <= 0 (cosine sim is signed).
    deg_loss = jnp.sum(jnp.log(rowsum * (1.0 + 1e-5))) / float(N)

    # ---------------- GTUNet stand-ins, both branches batched block-diagonally ------
    # TODO(synk): GTUNet source not provided; stand-in = 2-layer dense graph conv A@X@W.
    gx = jnp.dot(G, fused, preferred_element_type=F32)                # G @ [x_img | x_ph]
    h1 = jnp.maximum(jnp.dot(gx, W("gcn1_w"), preferred_element_type=F32) + W("gcn1_b"), 0.0)
    gh = jnp.dot(G, h1, preferred_element_type=F32)
    E = jnp.dot(gh, W("gcn2_w"), preferred_element_type=F32) + W("gcn2_b")   # (N, 2*out)
    img_e, ph_e = E[:, :out], E[:, out:]

    # ---------------- multimodal attention (3 linears as one block-diag dot) --------
    shared = 0.5 * (img_e + ph_e)
    cat3 = jnp.concatenate([img_e, ph_e, shared], axis=-1)            # (N, 3*out)
    A = jnp.tanh(jnp.dot(cat3, W("att_w"), preferred_element_type=F32) + W("att_b"))
    ia, pa, sa = A[:, :out], A[:, out:2 * out], A[:, 2 * out:]
    joint = sa * shared + ia * img_e + pa * ph_e

    # trace(A @ A.T) == sum(A*A)
    ti = jnp.sum(ia * ia)
    tp = jnp.sum(pa * pa)
    ts = jnp.sum(sa * sa)                                             # no eps (matches reference)
    si = ti / ts
    sp = tp / ts
    m = jnp.maximum(si, sp)
    ei = jnp.exp(si - m)
    ep = jnp.exp(sp - m)
    img_weight = ei / (ei + ep)
    ph_weight = ep / (ei + ep)

    # ---------------- smoothness traces: L@E = rowsum*E - G@E (L never built) -------
    le = rowsum * E - jnp.dot(G, E, preferred_element_type=F32)
    prod = E * le
    img_smh = jnp.sum(prod[:, :out]) / float(N * N)
    ph_smh = jnp.sum(prod[:, out:]) / float(N * N)

    img_loss = cfg["smh"] * img_smh + cfg["deg"] * deg_loss
    ph_loss = cfg["smh"] * ph_smh + cfg["deg"] * deg_loss
    reward_loss = cfg["val"] * (1.0 / (value + 1e-5))
    graph_loss = img_weight * img_loss + ph_weight * (ph_loss + reward_loss)

    # ---------------- classifier (eval-BN scale already folded into clf2_w) ---------
    hc = jnp.maximum(jnp.dot(joint, W("clf1_w"), preferred_element_type=F32) + W("clf1_b"), 0.0)
    out_ref[...] = jnp.dot(hc, W("clf2_w"), preferred_element_type=F32) + W("clf2_b")
    loss_ref[0] = graph_loss


# ----------------------------------------------------------------------------
# Parameter construction + slab packing
# ----------------------------------------------------------------------------
class Args:
    pass


def init_params(key, args):
    ks = jax.random.split(key, 16)
    nd, hid, out = args.node_dim, args.hidden, args.out
    S = args.num_scores
    p = {}

    def lin(k, i, o, scale=0.1):
        kw, kb = jax.random.split(k)
        return (scale * jax.random.normal(kw, (i, o), F32),
                scale * jax.random.normal(kb, (1, o), F32))

    # VAE encoder (decoder / VAE losses are not on MM_GTUNets' forward output path).
    p["vae_e1_w"], p["vae_e1_b"] = lin(ks[0], S, 256)
    p["vae_e2_w"], p["vae_e2_b"] = lin(ks[1], 256, 2 * nd)   # [mu | logvar] combined

    # RP attention: CustomConv2d(3->1, k=1); the SAME module is reused for every score, so
    # its in-place weight mutation is unrolled into per-step weights.
    cw = jnp.abs(0.5 * jax.random.normal(ks[2], (3,), F32))
    w0, w1, w2 = cw[0], -cw[1], cw[2]
    steps = []
    for _ in range(S):
        w1 = -jnp.maximum(jnp.abs(w1), w1 + w2)
        w0 = jnp.maximum(w0, w2)
        steps.append(jnp.stack([w0, w1, w2]))
    p["rp_conv_w_steps"] = jnp.stack(steps)                   # [S, 3]  (SMEM input)
    mix = jax.random.uniform(ks[3], (S,), F32)
    p["rp_mix_w"] = mix / jnp.sum(mix)                        # [S]     (SMEM input)

    # Multimodal attention linears.
    p["mm_img_w"], p["mm_img_b"] = lin(ks[4], out, out)
    p["mm_ph_w"], p["mm_ph_b"] = lin(ks[5], out, out)
    p["mm_shared_w"], p["mm_shared_b"] = lin(ks[6], out, out)

    # GTUNet stand-ins (img / ph branches).
    p["img_g1_w"], p["img_g1_b"] = lin(ks[7], nd, hid)
    p["img_g2_w"], p["img_g2_b"] = lin(ks[8], hid, out)
    p["ph_g1_w"], p["ph_g1_b"] = lin(ks[9], nd, hid)
    p["ph_g2_w"], p["ph_g2_b"] = lin(ks[10], hid, out)

    # Classifier.
    p["clf1_w"], p["clf1_b"] = lin(ks[11], out, 256)
    p["clf2_w"], p["clf2_b"] = lin(ks[12], 256, args.num_classes)
    return p


def pack_params(p):
    """Pack all matmul weights into one 256-lane f32 slab (row offsets 8-aligned)."""
    bd = jax.scipy.linalg.block_diag

    # BatchNorm1d eval with initial running stats (mean=0,var=1,gamma=1,beta=0): pure scale,
    # folded into the following linear's weight (commutes past ReLU since scale > 0).
    bn_scale = float(1.0 / (1.0 + 1e-5) ** 0.5)

    entries = [
        ("vae_e1_w", p["vae_e1_w"]), ("vae_e1_b", p["vae_e1_b"]),
        ("vae_e2_w", p["vae_e2_w"]), ("vae_e2_b", p["vae_e2_b"]),
        ("gcn1_w", bd(p["img_g1_w"], p["ph_g1_w"])),
        ("gcn1_b", jnp.concatenate([p["img_g1_b"], p["ph_g1_b"]], axis=-1)),
        ("gcn2_w", bd(p["img_g2_w"], p["ph_g2_w"])),
        ("gcn2_b", jnp.concatenate([p["img_g2_b"], p["ph_g2_b"]], axis=-1)),
        ("att_w", bd(p["mm_img_w"], p["mm_ph_w"], p["mm_shared_w"])),
        ("att_b", jnp.concatenate([p["mm_img_b"], p["mm_ph_b"], p["mm_shared_b"]], axis=-1)),
        ("clf1_w", p["clf1_w"]), ("clf1_b", p["clf1_b"]),
        ("clf2_w", bn_scale * p["clf2_w"]), ("clf2_b", p["clf2_b"]),
    ]

    layout = {}
    blocks = []
    row = 0
    for name, a in entries:
        a = jnp.asarray(a, F32)
        r, c = a.shape
        assert c <= LANES
        layout[name] = (row, (r, c))
        rp = -(-r // 8) * 8                                   # 8-sublane aligned offsets
        blk = jnp.zeros((rp, LANES), F32).at[:r, :c].set(a)
        blocks.append(blk)
        row += rp
    slab = jnp.concatenate(blocks, axis=0)
    return slab, layout


# ----------------------------------------------------------------------------
# Forward pass (one pallas_call, one jit)
# ----------------------------------------------------------------------------
def _forward_impl(layout, cfg, slab, cw, mix, img_features, ph_features, affinity_graphs, eps):
    N, S, ncls = cfg["N"], cfg["S"], cfg["ncls"]

    # Repack affinity graphs lane-dense: plane (s,k) -> columns [(s*3+k)*N : (s*3+k+1)*N].
    aff_packed = jnp.transpose(
        affinity_graphs.astype(F32).reshape(S * 3, N, N), (1, 0, 2)).reshape(N, S * 3 * N)

    kernel = functools.partial(_fused_forward_kernel, layout, cfg)
    outputs, loss = pl.pallas_call(
        kernel,
        out_shape=(jax.ShapeDtypeStruct((N, ncls), F32),
                   jax.ShapeDtypeStruct((1,), F32)),
        in_specs=[_smem(), _smem(), _vmem(), _vmem(), _vmem(), _vmem(), _vmem()],
        out_specs=(_vmem(), _smem()),
    )(cw, mix, slab,
      img_features.astype(F32), ph_features.astype(F32), aff_packed, eps.astype(F32))
    return outputs, loss[0]


def make_forward(args, layout):
    cfg = dict(N=args.num_subjects, S=args.num_scores, nd=args.node_dim,
               hid=args.hidden, out=args.out, ncls=args.num_classes,
               smh=float(args.smh), deg=float(args.deg), val=float(args.val))
    return jax.jit(functools.partial(_forward_impl, layout, cfg))


# ----------------------------------------------------------------------------
# Driver
# ----------------------------------------------------------------------------
if __name__ == "__main__":
    args = Args()
    args.num_subjects = 16      # N (graph nodes / batch rows)
    args.node_dim = 32          # VAE latent dim & U-net input dim
    args.hidden = 32
    args.out = 32               # attention channel
    args.num_scores = 2         # len(args.scores)
    args.num_classes = 2
    args.smh = 0.1
    args.deg = 0.1
    args.val = 1.0

    key = jax.random.PRNGKey(0)
    k_param, k_img, k_ph, k_aff, k_eps = jax.random.split(key, 5)

    params = init_params(k_param, args)
    slab, layout = pack_params(params)
    forward = make_forward(args, layout)

    img_features = jax.random.normal(k_img, (args.num_subjects, args.node_dim), F32)
    ph_features = jax.random.normal(k_ph, (args.num_subjects, args.num_scores), F32)
    affinity_graphs = jax.random.uniform(
        k_aff, (args.num_scores, 3, args.num_subjects, args.num_subjects), F32)
    eps = jax.random.normal(k_eps, (args.num_subjects, args.node_dim), F32)

    outputs, graph_loss = forward(
        slab, params["rp_conv_w_steps"], params["rp_mix_w"],
        img_features, ph_features, affinity_graphs, eps)

    jax.block_until_ready(outputs)
    jax.block_until_ready(graph_loss)
    assert outputs.shape == (args.num_subjects, args.num_classes)
    print("KERNEL_OK")
</pallas_src>

<mosaic_0001>
module attributes {stable_mosaic.version = 11 : i64} {
  func.func @_fused_forward_kernel(%arg0: memref<2x3xf32, #tpu.memory_space<smem>>, %arg1: memref<2xf32, #tpu.memory_space<smem>>, %arg2: memref<832x256xf32, #tpu.memory_space<vmem>>, %arg3: memref<16x32xf32, #tpu.memory_space<vmem>>, %arg4: memref<16x2xf32, #tpu.memory_space<vmem>>, %arg5: memref<16x96xf32, #tpu.memory_space<vmem>>, %arg6: memref<16x32xf32, #tpu.memory_space<vmem>>, %arg7: memref<16x2xf32, #tpu.memory_space<vmem>>, %arg8: memref<1xf32, #tpu.memory_space<smem>>) attributes {dimension_semantics = [], scalar_prefetch = 0 : i64, scratch_operands = 0 : i64, tpu.core_type = #tpu.core_type<tc>} {
    %c0 = arith.constant 0 : index
    %c0_0 = arith.constant 0 : index
    %0 = vector.load %arg4[%c0, %c0_0] : memref<16x2xf32, #tpu.memory_space<vmem>>, vector<16x2xf32>
    %c0_1 = arith.constant 0 : index
    %c0_2 = arith.constant 0 : index
    %1 = vector.load %arg2[%c0_1, %c0_2] : memref<832x256xf32, #tpu.memory_space<vmem>>, vector<2x256xf32>
    %cst = arith.constant dense<0.000000e+00> : vector<16x256xf32>
    %2 = tpu.matmul %0, %1, %cst {dimension_numbers = #tpu.dot_dimension_numbers<[1], [0], [0], [1], [0, 0, 1, 1], [], []>} : vector<16x2xf32>, vector<2x256xf32>, vector<16x256xf32> -> vector<16x256xf32>
    %c8 = arith.constant 8 : index
    %c0_3 = arith.constant 0 : index
    %3 = vector.load %arg2[%c8, %c0_3] : memref<832x256xf32, #tpu.memory_space<vmem>>, vector<1x256xf32>
    %4 = vector.broadcast %3 : vector<1x256xf32> to vector<16x256xf32>
    %5 = arith.addf %2, %4 : vector<16x256xf32>
    %cst_4 = arith.constant 0.000000e+00 : f32
    %6 = vector.broadcast %cst_4 : f32 to vector<16x256xf32>
    %7 = arith.maximumf %5, %6 : vector<16x256xf32>
    %c16 = arith.constant 16 : index
    %c0_5 = arith.constant 0 : index
    %8 = vector.load %arg2[%c16, %c0_5] : memref<832x256xf32, #tpu.memory_space<vmem>>, vector<256x64xf32>
    %cst_6 = arith.constant dense<0.000000e+00> : vector<16x64xf32>
    %9 = tpu.matmul %7, %8, %cst_6 {dimension_numbers = #tpu.dot_dimension_numbers<[1], [0], [0], [1], [0, 0, 1, 1], [], []>} : vector<16x256xf32>, vector<256x64xf32>, vector<16x64xf32> -> vector<16x64xf32>
    %c272 = arith.constant 272 : index
    %c0_7 = arith.constant 0 : index
    %10 = vector.load %arg2[%c272, %c0_7] : memref<832x256xf32, #tpu.memory_space<vmem>>, vector<1x64xf32>
    %11 = vector.broadcast %10 : vector<1x64xf32> to vector<16x64xf32>
    %12 = arith.addf %9, %11 : vector<16x64xf32>
    %13 = vector.extract_strided_slice %12 {offsets = [0, 0], sizes = [16, 32], strides = [1, 1]} : vector<16x64xf32> to vector<16x32xf32>
    %14 = vector.extract_strided_slice %12 {offsets = [0, 32], sizes = [16, 32], strides = [1, 1]} : vector<16x64xf32> to vector<16x32xf32>
    %c0_8 = arith.constant 0 : index
    %c0_9 = arith.constant 0 : index
    %15 = vector.load %arg6[%c0_8, %c0_9] : memref<16x32xf32, #tpu.memory_space<vmem>>, vector<16x32xf32>
    %cst_10 = arith.constant 5.000000e-01 : f32
    %16 = vector.broadcast %cst_10 : f32 to vector<16x32xf32>
    %17 = arith.mulf %16, %14 : vector<16x32xf32>
    %18 = math.exp %17 : vector<16x32xf32>
    %19 = arith.mulf %15, %18 : vector<16x32xf32>
    %20 = arith.addf %13, %19 : vector<16x32xf32>
    %cst_11 = arith.constant 0.000000e+00 : f32
    %21 = vector.broadcast %cst_11 : f32 to vector<16x16xf32>
    %c0_12 = arith.constant 0 : index
    %c0_13 = arith.constant 0 : index
    %22 = vector.load %arg5[%c0_12, %c0_13] : memref<16x96xf32, #tpu.memory_space<vmem>>, vector<16x16xf32>
    %c0_14 = arith.constant 0 : index
    %c16_15 = arith.constant 16 : index
    %23 = vector.load %arg5[%c0_14, %c16_15] : memref<16x96xf32, #tpu.memory_space<vmem>>, vector<16x16xf32>
    %c0_16 = arith.constant 0 : index
    %c32 = arith.constant 32 : index
    %24 = vector.load %arg5[%c0_16, %c32] : memref<16x96xf32, #tpu.memory_space<vmem>>, vector<16x16xf32>
    %c0_17 = arith.constant 0 : index
    %c0_18 = arith.constant 0 : index
    %25 = memref.load %arg0[%c0_17, %c0_18] : memref<2x3xf32, #tpu.memory_space<smem>>
    %c0_19 = arith.constant 0 : index
    %c1 = arith.constant 1 : index
    %26 = memref.load %arg0[%c0_19, %c1] : memref<2x3xf32, #tpu.memory_space<smem>>
    %c0_20 = arith.constant 0 : index
    %c2 = arith.constant 2 : index
    %27 = memref.load %arg0[%c0_20, %c2] : memref<2x3xf32, #tpu.memory_space<smem>>
    %28 = vector.broadcast %25 : f32 to vector<16x16xf32>
    %29 = arith.mulf %28, %22 : vector<16x16xf32>
    %30 = vector.broadcast %26 : f32 to vector<16x16xf32>
    %31 = arith.mulf %30, %23 : vector<16x16xf32>
    %32 = arith.addf %29, %31 : vector<16x16xf32>
    %33 = vector.broadcast %27 : f32 to vector<16x16xf32>
    %34 = arith.mulf %33, %24 : vector<16x16xf32>
    %35 = arith.addf %32, %34 : vector<16x16xf32>
    %c0_21 = arith.constant 0 : index
    %36 = memref.load %arg1[%c0_21] : memref<2xf32, #tpu.memory_space<smem>>
    %37 = arith.negf %35 : vector<16x16xf32>
    %38 = math.exp %37 : vector<16x16xf32>
    %cst_22 = arith.constant 1.000000e+00 : f32
    %39 = vector.broadcast %cst_22 : f32 to vector<16x16xf32>
    %40 = arith.addf %39, %38 : vector<16x16xf32>
    %41 = arith.divf %39, %40 : vector<16x16xf32>
    %42 = vector.broadcast %36 : f32 to vector<16x16xf32>
    %43 = arith.mulf %42, %41 : vector<16x16xf32>
    %44 = arith.addf %21, %43 : vector<16x16xf32>
    %45 = vector.broadcast %25 : f32 to vector<16x16xf32>
    %46 = arith.mulf %45, %22 : vector<16x16xf32>
    %47 = vector.broadcast %26 : f32 to vector<16x16xf32>
    %48 = arith.mulf %47, %23 : vector<16x16xf32>
    %49 = arith.addf %46, %48 : vector<16x16xf32>
    %cst_23 = arith.constant 0.000000e+00 : f32
    %50 = vector.broadcast %cst_23 : f32 to vector<16x16xf32>
    %51 = arith.maximumf %49, %50 : vector<16x16xf32>
    %52 = vector.shape_cast %51 : vector<16x16xf32> to vector<1x16x16xf32>
    %cst_24 = arith.constant dense<0.000000e+00> : vector<1xf32>
    %53 = vector.multi_reduction <add>, %52, %cst_24 [1, 2] : vector<1x16x16xf32> to vector<1xf32>
    %54 = vector.shape_cast %53 : vector<1xf32> to vector<1x1x1xf32>
    %55 = vector.extract %54[0, 0, 0] : f32 from vector<1x1x1xf32>
    %cst_25 = arith.constant 0.000000e+00 : f32
    %56 = arith.addf %cst_25, %55 : f32
    %c0_26 = arith.constant 0 : index
    %c48 = arith.constant 48 : index
    %57 = vector.load %arg5[%c0_26, %c48] : memref<16x96xf32, #tpu.memory_space<vmem>>, vector<16x16xf32>
    %c0_27 = arith.constant 0 : index
    %c64 = arith.constant 64 : index
    %58 = vector.load %arg5[%c0_27, %c64] : memref<16x96xf32, #tpu.memory_space<vmem>>, vector<16x16xf32>
    %c0_28 = arith.constant 0 : index
    %c80 = arith.constant 80 : index
    %59 = vector.load %arg5[%c0_28, %c80] : memref<16x96xf32, #tpu.memory_space<vmem>>, vector<16x16xf32>
    %c1_29 = arith.constant 1 : index
    %c0_30 = arith.constant 0 : index
    %60 = memref.load %arg0[%c1_29, %c0_30] : memref<2x3xf32, #tpu.memory_space<smem>>
    %c1_31 = arith.constant 1 : index
    %c1_32 = arith.constant 1 : index
    %61 = memref.load %arg0[%c1_31, %c1_32] : memref<2x3xf32, #tpu.memory_space<smem>>
    %c1_33 = arith.constant 1 : index
    %c2_34 = arith.constant 2 : index
    %62 = memref.load %arg0[%c1_33, %c2_34] : memref<2x3xf32, #tpu.memory_space<smem>>
    %63 = vector.broadcast %60 : f32 to vector<16x16xf32>
    %64 = arith.mulf %63, %57 : vector<16x16xf32>
    %65 = vector.broadcast %61 : f32 to vector<16x16xf32>
    %66 = arith.mulf %65, %58 : vector<16x16xf32>
    %67 = arith.addf %64, %66 : vector<16x16xf32>
    %68 = vector.broadcast %62 : f32 to vector<16x16xf32>
    %69 = arith.mulf %68, %59 : vector<16x16xf32>
    %70 = arith.addf %67, %69 : vector<16x16xf32>
    %c1_35 = arith.constant 1 : index
    %71 = memref.load %arg1[%c1_35] : memref<2xf32, #tpu.memory_space<smem>>
    %72 = arith.negf %70 : vector<16x16xf32>
    %73 = math.exp %72 : vector<16x16xf32>
    %cst_36 = arith.constant 1.000000e+00 : f32
    %74 = vector.broadcast %cst_36 : f32 to vector<16x16xf32>
    %75 = arith.addf %74, %73 : vector<16x16xf32>
    %76 = arith.divf %74, %75 : vector<16x16xf32>
    %77 = vector.broadcast %71 : f32 to vector<16x16xf32>
    %78 = arith.mulf %77, %76 : vector<16x16xf32>
    %79 = arith.addf %44, %78 : vector<16x16xf32>
    %80 = vector.broadcast %60 : f32 to vector<16x16xf32>
    %81 = arith.mulf %80, %57 : vector<16x16xf32>
    %82 = vector.broadcast %61 : f32 to vector<16x16xf32>
    %83 = arith.mulf %82, %58 : vector<16x16xf32>
    %84 = arith.addf %81, %83 : vector<16x16xf32>
    %cst_37 = arith.constant 0.000000e+00 : f32
    %85 = vector.broadcast %cst_37 : f32 to vector<16x16xf32>
    %86 = arith.maximumf %84, %85 : vector<16x16xf32>
    %87 = vector.shape_cast %86 : vector<16x16xf32> to vector<1x16x16xf32>
    %cst_38 = arith.constant dense<0.000000e+00> : vector<1xf32>
    %88 = vector.multi_reduction <add>, %87, %cst_38 [1, 2] : vector<1x16x16xf32> to vector<1xf32>
    %89 = vector.shape_cast %88 : vector<1xf32> to vector<1x1x1xf32>
    %90 = vector.extract %89[0, 0, 0] : f32 from vector<1x1x1xf32>
    %91 = arith.addf %56, %90 : f32
    %cst_39 = arith.constant 2.560000e+02 : f32
    %92 = arith.divf %91, %cst_39 : f32
    %c0_40 = arith.constant 0 : index
    %c0_41 = arith.constant 0 : index
    %93 = vector.load %arg3[%c0_40, %c0_41] : memref<16x32xf32, #tpu.memory_space<vmem>>, vector<16x32xf32>
    %94 = tpu.concatenate %93, %20 in 1 : vector<16x32xf32>, vector<16x32xf32> -> vector<16x64xf32>
    %95 = arith.mulf %94, %94 : vector<16x64xf32>
    %cst_42 = arith.constant dense<0.000000e+00> : vector<16xf32>
    %96 = vector.multi_reduction <add>, %95, %cst_42 [1] : vector<16x64xf32> to vector<16xf32>
    %97 = vector.shape_cast %96 : vector<16xf32> to vector<16x1xf32>
    %98 = math.sqrt %97 : vector<16x1xf32>
    %cst_43 = arith.constant 9.99999993E-9 : f32
    %99 = vector.broadcast %cst_43 : f32 to vector<16x1xf32>
    %100 = arith.addf %98, %99 : vector<16x1xf32>
    %cst_44 = arith.constant 1.000000e+00 : f32
    %101 = vector.broadcast %cst_44 : f32 to vector<16x1xf32>
    %102 = arith.divf %101, %100 : vector<16x1xf32>
    %103 = vector.broadcast %102 : vector<16x1xf32> to vector<16x64xf32>
    %104 = arith.mulf %94, %103 : vector<16x64xf32>
    %cst_45 = arith.constant dense<0.000000e+00> : vector<16x16xf32>
    %105 = tpu.matmul %104, %104, %cst_45 {dimension_numbers = #tpu.dot_dimension_numbers<[1], [1], [0], [0], [0, 0, 1, 0], [], []>} : vector<16x64xf32>, vector<16x64xf32>, vector<16x16xf32> -> vector<16x16xf32>
    %106 = arith.mulf %105, %79 : vector<16x16xf32>
    %cst_46 = arith.constant dense<0.000000e+00> : vector<16xf32>
    %107 = vector.multi_reduction <add>, %106, %cst_46 [1] : vector<16x16xf32> to vector<16xf32>
    %108 = vector.shape_cast %107 : vector<16xf32> to vector<16x1xf32>
    %cst_47 = arith.constant 1.000010e+00 : f32
    %109 = vector.broadcast %cst_47 : f32 to vector<16x1xf32>
    %110 = arith.mulf %108, %109 : vector<16x1xf32>
    %111 = math.log %110 : vector<16x1xf32>
    %112 = vector.shape_cast %111 : vector<16x1xf32> to vector<1x16x1xf32>
    %cst_48 = arith.constant dense<0.000000e+00> : vector<1xf32>
    %113 = vector.multi_reduction <add>, %112, %cst_48 [1, 2] : vector<1x16x1xf32> to vector<1xf32>
    %114 = vector.shape_cast %113 : vector<1xf32> to vector<1x1x1xf32>
    %115 = vector.extract %114[0, 0, 0] : f32 from vector<1x1x1xf32>
    %cst_49 = arith.constant 1.600000e+01 : f32
    %116 = arith.divf %115, %cst_49 : f32
    %cst_50 = arith.constant dense<0.000000e+00> : vector<16x64xf32>
    %117 = tpu.matmul %106, %94, %cst_50 {dimension_numbers = #tpu.dot_dimension_numbers<[1], [0], [0], [1], [0, 0, 1, 1], [], []>} : vector<16x16xf32>, vector<16x64xf32>, vector<16x64xf32> -> vector<16x64xf32>
    %c280 = arith.constant 280 : index
    %c0_51 = arith.constant 0 : index
    %118 = vector.load %arg2[%c280, %c0_51] : memref<832x256xf32, #tpu.memory_space<vmem>>, vector<64x64xf32>
    %cst_52 = arith.constant dense<0.000000e+00> : vector<16x64xf32>
    %119 = tpu.matmul %117, %118, %cst_52 {dimension_numbers = #tpu.dot_dimension_numbers<[1], [0], [0], [1], [0, 0, 1, 1], [], []>} : vector<16x64xf32>, vector<64x64xf32>, vector<16x64xf32> -> vector<16x64xf32>
    %c344 = arith.constant 344 : index
    %c0_53 = arith.constant 0 : index
    %120 = vector.load %arg2[%c344, %c0_53] : memref<832x256xf32, #tpu.memory_space<vmem>>, vector<1x64xf32>
    %121 = vector.broadcast %120 : vector<1x64xf32> to vector<16x64xf32>
    %122 = arith.addf %119, %121 : vector<16x64xf32>
    %cst_54 = arith.constant 0.000000e+00 : f32
    %123 = vector.broadcast %cst_54 : f32 to vector<16x64xf32>
    %124 = arith.maximumf %122, %123 : vector<16x64xf32>
    %cst_55 = arith.constant dense<0.000000e+00> : vector<16x64xf32>
    %125 = tpu.matmul %106, %124, %cst_55 {dimension_numbers = #tpu.dot_dimension_numbers<[1], [0], [0], [1], [0, 0, 1, 1], [], []>} : vector<16x16xf32>, vector<16x64xf32>, vector<16x64xf32> -> vector<16x64xf32>
    %c352 = arith.constant 352 : index
    %c0_56 = arith.constant 0 : index
    %126 = vector.load %arg2[%c352, %c0_56] : memref<832x256xf32, #tpu.memory_space<vmem>>, vector<64x64xf32>
    %cst_57 = arith.constant dense<0.000000e+00> : vector<16x64xf32>
    %127 = tpu.matmul %125, %126, %cst_57 {dimension_numbers = #tpu.dot_dimension_numbers<[1], [0], [0], [1], [0, 0, 1, 1], [], []>} : vector<16x64xf32>, vector<64x64xf32>, vector<16x64xf32> -> vector<16x64xf32>
    %c416 = arith.constant 416 : index
    %c0_58 = arith.constant 0 : index
    %128 = vector.load %arg2[%c416, %c0_58] : memref<832x256xf32, #tpu.memory_space<vmem>>, vector<1x64xf32>
    %129 = vector.broadcast %128 : vector<1x64xf32> to vector<16x64xf32>
    %130 = arith.addf %127, %129 : vector<16x64xf32>
    %131 = vector.extract_strided_slice %130 {offsets = [0, 0], sizes = [16, 32], strides = [1, 1]} : vector<16x64xf32> to vector<16x32xf32>
    %132 = vector.extract_strided_slice %130 {offsets = [0, 32], sizes = [16, 32], strides = [1, 1]} : vector<16x64xf32> to vector<16x32xf32>
    %133 = arith.addf %131, %132 : vector<16x32xf32>
    %cst_59 = arith.constant 5.000000e-01 : f32
    %134 = vector.broadcast %cst_59 : f32 to vector<16x32xf32>
    %135 = arith.mulf %134, %133 : vector<16x32xf32>
    %136 = tpu.concatenate %131, %132, %135 in 1 : vector<16x32xf32>, vector<16x32xf32>, vector<16x32xf32> -> vector<16x96xf32>
    %c424 = arith.constant 424 : index
    %c0_60 = arith.constant 0 : index
    %137 = vector.load %arg2[%c424, %c0_60] : memref<832x256xf32, #tpu.memory_space<vmem>>, vector<96x96xf32>
    %cst_61 = arith.constant dense<0.000000e+00> : vector<16x96xf32>
    %138 = tpu.matmul %136, %137, %cst_61 {dimension_numbers = #tpu.dot_dimension_numbers<[1], [0], [0], [1], [0, 0, 1, 1], [], []>} : vector<16x96xf32>, vector<96x96xf32>, vector<16x96xf32> -> vector<16x96xf32>
    %c520 = arith.constant 520 : index
    %c0_62 = arith.constant 0 : index
    %139 = vector.load %arg2[%c520, %c0_62] : memref<832x256xf32, #tpu.memory_space<vmem>>, vector<1x96xf32>
    %140 = vector.broadcast %139 : vector<1x96xf32> to vector<16x96xf32>
    %141 = arith.addf %138, %140 : vector<16x96xf32>
    %142 = math.tanh %141 : vector<16x96xf32>
    %143 = vector.extract_strided_slice %142 {offsets = [0, 0], sizes = [16, 32], strides = [1, 1]} : vector<16x96xf32> to vector<16x32xf32>
    %144 = vector.extract_strided_slice %142 {offsets = [0, 32], sizes = [16, 32], strides = [1, 1]} : vector<16x96xf32> to vector<16x32xf32>
    %145 = vector.extract_strided_slice %142 {offsets = [0, 64], sizes = [16, 32], strides = [1, 1]} : vector<16x96xf32> to vector<16x32xf32>
    %146 = arith.mulf %145, %135 : vector<16x32xf32>
    %147 = arith.mulf %143, %131 : vector<16x32xf32>
    %148 = arith.addf %146, %147 : vector<16x32xf32>
    %149 = arith.mulf %144, %132 : vector<16x32xf32>
    %150 = arith.addf %148, %149 : vector<16x32xf32>
    %151 = arith.mulf %143, %143 : vector<16x32xf32>
    %152 = vector.shape_cast %151 : vector<16x32xf32> to vector<1x16x32xf32>
    %cst_63 = arith.constant dense<0.000000e+00> : vector<1xf32>
    %153 = vector.multi_reduction <add>, %152, %cst_63 [1, 2] : vector<1x16x32xf32> to vector<1xf32>
    %154 = vector.shape_cast %153 : vector<1xf32> to vector<1x1x1xf32>
    %155 = vector.extract %154[0, 0, 0] : f32 from vector<1x1x1xf32>
    %156 = arith.mulf %144, %144 : vector<16x32xf32>
    %157 = vector.shape_cast %156 : vector<16x32xf32> to vector<1x16x32xf32>
    %cst_64 = arith.constant dense<0.000000e+00> : vector<1xf32>
    %158 = vector.multi_reduction <add>, %157, %cst_64 [1, 2] : vector<1x16x32xf32> to vector<1xf32>
    %159 = vector.shape_cast %158 : vector<1xf32> to vector<1x1x1xf32>
    %160 = vector.extract %159[0, 0, 0] : f32 from vector<1x1x1xf32>
    %161 = arith.mulf %145, %145 : vector<16x32xf32>
    %162 = vector.shape_cast %161 : vector<16x32xf32> to vector<1x16x32xf32>
    %cst_65 = arith.constant dense<0.000000e+00> : vector<1xf32>
    %163 = vector.multi_reduction <add>, %162, %cst_65 [1, 2] : vector<1x16x32xf32> to vector<1xf32>
    %164 = vector.shape_cast %163 : vector<1xf32> to vector<1x1x1xf32>
    %165 = vector.extract %164[0, 0, 0] : f32 from vector<1x1x1xf32>
    %166 = arith.divf %155, %165 : f32
    %167 = arith.divf %160, %165 : f32
    %168 = arith.maximumf %166, %167 : f32
    %169 = arith.subf %166, %168 : f32
    %170 = math.exp %169 : f32
    %171 = arith.subf %167, %168 : f32
    %172 = math.exp %171 : f32
    %173 = arith.addf %170, %172 : f32
    %174 = arith.divf %170, %173 : f32
    %175 = arith.addf %170, %172 : f32
    %176 = arith.divf %172, %175 : f32
    %177 = vector.broadcast %108 : vector<16x1xf32> to vector<16x64xf32>
    %178 = arith.mulf %177, %130 : vector<16x64xf32>
    %cst_66 = arith.constant dense<0.000000e+00> : vector<16x64xf32>
    %179 = tpu.matmul %106, %130, %cst_66 {dimension_numbers = #tpu.dot_dimension_numbers<[1], [0], [0], [1], [0, 0, 1, 1], [], []>} : vector<16x16xf32>, vector<16x64xf32>, vector<16x64xf32> -> vector<16x64xf32>
    %180 = arith.subf %178, %179 : vector<16x64xf32>
    %181 = arith.mulf %130, %180 : vector<16x64xf32>
    %182 = vector.extract_strided_slice %181 {offsets = [0, 0], sizes = [16, 32], strides = [1, 1]} : vector<16x64xf32> to vector<16x32xf32>
    %183 = vector.shape_cast %182 : vector<16x32xf32> to vector<1x16x32xf32>
    %cst_67 = arith.constant dense<0.000000e+00> : vector<1xf32>
    %184 = vector.multi_reduction <add>, %183, %cst_67 [1, 2] : vector<1x16x32xf32> to vector<1xf32>
    %185 = vector.shape_cast %184 : vector<1xf32> to vector<1x1x1xf32>
    %186 = vector.extract %185[0, 0, 0] : f32 from vector<1x1x1xf32>
    %cst_68 = arith.constant 2.560000e+02 : f32
    %187 = arith.divf %186, %cst_68 : f32
    %188 = vector.extract_strided_slice %181 {offsets = [0, 32], sizes = [16, 32], strides = [1, 1]} : vector<16x64xf32> to vector<16x32xf32>
    %189 = vector.shape_cast %188 : vector<16x32xf32> to vector<1x16x32xf32>
    %cst_69 = arith.constant dense<0.000000e+00> : vector<1xf32>
    %190 = vector.multi_reduction <add>, %189, %cst_69 [1, 2] : vector<1x16x32xf32> to vector<1xf32>
    %191 = vector.shape_cast %190 : vector<1xf32> to vector<1x1x1xf32>
    %192 = vector.extract %191[0, 0, 0] : f32 from vector<1x1x1xf32>
    %cst_70 = arith.constant 2.560000e+02 : f32
    %193 = arith.divf %192, %cst_70 : f32
    %cst_71 = arith.constant 1.000000e-01 : f32
    %194 = arith.mulf %cst_71, %187 : f32
    %cst_72 = arith.constant 1.000000e-01 : f32
    %195 = arith.mulf %cst_72, %116 : f32
    %196 = arith.addf %194, %195 : f32
    %cst_73 = arith.constant 1.000000e-01 : f32
    %197 = arith.mulf %cst_73, %193 : f32
    %cst_74 = arith.constant 1.000000e-01 : f32
    %198 = arith.mulf %cst_74, %116 : f32
    %199 = arith.addf %197, %198 : f32
    %cst_75 = arith.constant 9.99999974E-6 : f32
    %200 = arith.addf %92, %cst_75 : f32
    %cst_76 = arith.constant 1.000000e+00 : f32
    %201 = arith.divf %cst_76, %200 : f32
    %cst_77 = arith.constant 1.000000e+00 : f32
    %202 = arith.mulf %cst_77, %201 : f32
    %203 = arith.mulf %174, %196 : f32
    %204 = arith.addf %199, %202 : f32
    %205 = arith.mulf %176, %204 : f32
    %206 = arith.addf %203, %205 : f32
    %c528 = arith.constant 528 : index
    %c0_78 = arith.constant 0 : index
    %207 = vector.load %arg2[%c528, %c0_78] : memref<832x256xf32, #tpu.memory_space<vmem>>, vector<32x256xf32>
    %cst_79 = arith.constant dense<0.000000e+00> : vector<16x256xf32>
    %208 = tpu.matmul %150, %207, %cst_79 {dimension_numbers = #tpu.dot_dimension_numbers<[1], [0], [0], [1], [0, 0, 1, 1], [], []>} : vector<16x32xf32>, vector<32x256xf32>, vector<16x256xf32> -> vector<16x256xf32>
    %c560 = arith.constant 560 : index
    %c0_80 = arith.constant 0 : index
    %209 = vector.load %arg2[%c560, %c0_80] : memref<832x256xf32, #tpu.memory_space<vmem>>, vector<1x256xf32>
    %210 = vector.broadcast %209 : vector<1x256xf32> to vector<16x256xf32>
    %211 = arith.addf %208, %210 : vector<16x256xf32>
    %cst_81 = arith.constant 0.000000e+00 : f32
    %212 = vector.broadcast %cst_81 : f32 to vector<16x256xf32>
    %213 = arith.maximumf %211, %212 : vector<16x256xf32>
    %c568 = arith.constant 568 : index
    %c0_82 = arith.constant 0 : index
    %214 = vector.load %arg2[%c568, %c0_82] : memref<832x256xf32, #tpu.memory_space<vmem>>, vector<256x2xf32>
    %cst_83 = arith.constant dense<0.000000e+00> : vector<16x2xf32>
    %215 = tpu.matmul %213, %214, %cst_83 {dimension_numbers = #tpu.dot_dimension_numbers<[1], [0], [0], [1], [0, 0, 1, 1], [], []>} : vector<16x256xf32>, vector<256x2xf32>, vector<16x2xf32> -> vector<16x2xf32>
    %c824 = arith.constant 824 : index
    %c0_84 = arith.constant 0 : index
    %216 = vector.load %arg2[%c824, %c0_84] : memref<832x256xf32, #tpu.memory_space<vmem>>, vector<1x2xf32>
    %217 = vector.broadcast %216 : vector<1x2xf32> to vector<16x2xf32>
    %218 = arith.addf %215, %217 : vector<16x2xf32>
    %c0_85 = arith.constant 0 : index
    %c0_86 = arith.constant 0 : index
    %219 = vector.load %arg7[%c0_85, %c0_86] : memref<16x2xf32, #tpu.memory_space<vmem>>, vector<16x2xf32>
    tpu.vector_store %arg7[%c0_85, %c0_86], %218 {strides = array<i32>} : memref<16x2xf32, #tpu.memory_space<vmem>>, vector<16x2xf32>,
    %c0_87 = arith.constant 0 : index
    %220 = memref.load %arg8[%c0_87] : memref<1xf32, #tpu.memory_space<smem>>
    memref.store %206, %arg8[%c0_87] : memref<1xf32, #tpu.memory_space<smem>>
    return
  }
}

</mosaic_0001>

<llo_original>
// kernel: _forward_impl.1
$region0: #{_forward_impl.1}
  #allocation0 [shape = 'u32[]', space=smem, size = 0x4, offset = 0x4, fixed_abs, tag = 'smem constant byte address 0x4 - core index']
  #allocation1 [shape = 'u32[144,128]{1,0:T(1,128)}', space=vmem, size = 0x12000, scoped, tag = 'internal scratch']
  %s0 = inlined_call_operand.vmem [shape: f32[2,3], index: 0, kind: input, shape index: {}]
  %s1 = inlined_call_operand.vmem [shape: f32[2], index: 1, kind: input, shape index: {}]
  %s2 = inlined_call_operand.hbm [shape: f32[832,256], index: 2, kind: input, shape index: {}]
  %s3 = inlined_call_operand.vmem [shape: f32[16,32], index: 3, kind: input, shape index: {}]
  %s4 = inlined_call_operand.vmem [shape: f32[16,2], index: 4, kind: input, shape index: {}]
  %s5 = inlined_call_operand.vmem [shape: f32[16,96], index: 5, kind: input, shape index: {}]
  %s6 = inlined_call_operand.vmem [shape: f32[16,32], index: 6, kind: input, shape index: {}]
  %s7 = inlined_call_operand.vmem [shape: f32[16,2], index: 7, kind: output, shape index: {0}]
  %s8 = inlined_call_operand.hbm [shape: f32[1], index: 8, kind: output, shape index: {1}]
  %9 = xla_tuple %s7, %s8
  %s10 = sld [smem:[#allocation0]]
  $region58: #{_forward_impl.1} parent=0
    _
  %s12 = ssub.s32 1, %s10
  %s13 = scalar_select 0, %s12, %s10
  $region1: #{_forward_impl.1} parent=0
    #allocation2 [shape = 'u8[1024]{0}', space=smem, size = 0x400, scoped, tag = 'input window, operand 0, single buffered']
    #allocation3 [shape = 's32[1]{0}', space=sflag, size = 0x4, scoped, tag = 'scoped memory for _forward_impl.1']
    #allocation4 [shape = 's32[1]{0}', space=sflag, size = 0x4, scoped, tag = 'scoped memory for _forward_impl.1']
    #allocation5 [shape = 's32[1]{0}', space=sflag, size = 0x4, scoped, tag = 'scoped memory for _forward_impl.1']
    #allocation6 [shape = 'u8[512]{0}', space=smem, size = 0x200, scoped, tag = 'input window, operand 1, single buffered']
    #allocation7 [shape = 's32[1]{0}', space=sflag, size = 0x4, scoped, tag = 'scoped memory for _forward_impl.1']
    #allocation8 [shape = 'u8[851968]{0}', space=vmem, size = 0xd0000, scoped, tag = 'input window, operand 2, single buffered']
    #allocation9 [shape = 'u8[512]{0}', space=smem, size = 0x200, scoped, tag = 'output window, operand 1, single buffered']
    %14 = vsyncpa [#allocation5], 0
    %15 = vsyncpa [#allocation7], 0
    %16 = vsyncpa [#allocation3], 0
    %17 = vsyncpa [#allocation4], 0
    // Predicated region
    $region2: #{_forward_impl.1} parent=1 // pred_check
      _
    $region3: #{_forward_impl.1} parent=1 // pred_check_branch
      %19 = sbr.rel (0) target = $region5
    $region4: #{_forward_impl.1} parent=1 // pred_region
      %s21 = ssub.s32 32, 32
      %22 = vsyncadd [#allocation5], %s21
      %s24 = sshll.u32 %s0, 4
      %s25 = int_to_ptr.vmem [resolvable:$true] %s24
      %27 = dma.vmem_to_smem %s25, 32, [#allocation2], [#allocation5]
    $region5: #{_forward_impl.1} parent=1 // pred_fallthru
      _
    // Predicated region
    $region6: #{_forward_impl.1} parent=1 // pred_check
      _
    $region7: #{_forward_impl.1} parent=1 // pred_check_branch
      %29 = sbr.rel (0) target = $region9
    $region8: #{_forward_impl.1} parent=1 // pred_region
      %s31 = ssub.s32 16, 16
      %32 = vsyncadd [#allocation7], %s31
      %s34 = sshll.u32 %s1, 4
      %s35 = int_to_ptr.vmem [resolvable:$true] %s34
      %37 = dma.vmem_to_smem %s35, 16, [#allocation6], [#allocation7]
    $region9: #{_forward_impl.1} parent=1 // pred_fallthru
      _
    // Predicated region
    $region10: #{_forward_impl.1} parent=1 // pred_check
      _
    $region11: #{_forward_impl.1} parent=1 // pred_check_branch
      %39 = sbr.rel (0) target = $region13
    $region12: #{_forward_impl.1} parent=1 // pred_region
      %s41 = ssub.s32 26624, 26624
      %42 = vsyncadd [#allocation3], %s41
      %s43 = sshll.u32 [#allocation8], 4
      %s44 = int_to_ptr.vmem [resolvable:$true] %s43
      %49 = dma.hbm_to_vmem [thread:$0]  %s2, 26624, %s44, [#allocation3], 256, 256, 16
    $region13: #{_forward_impl.1} parent=1 // pred_fallthru
      _
    // Predicated region
    $region14: #{_forward_impl.1} parent=1 // pred_check
      _
    $region15: #{_forward_impl.1} parent=1 // pred_check_branch
      %51 = sbr.rel (0) target = $region17
    $region16: #{_forward_impl.1} parent=1 // pred_region
      _
    $region17: #{_forward_impl.1} parent=1 // pred_fallthru
      _
    // Predicated region
    $region18: #{_forward_impl.1} parent=1 // pred_check
      _
    $region19: #{_forward_impl.1} parent=1 // pred_check_branch
      %53 = sbr.rel (0) target = $region21
    $region20: #{_forward_impl.1} parent=1 // pred_region
      _
    $region21: #{_forward_impl.1} parent=1 // pred_fallthru
      _
    // Predicated region
    $region22: #{_forward_impl.1} parent=1 // pred_check
      _
    $region23: #{_forward_impl.1} parent=1 // pred_check_branch
      %55 = sbr.rel (0) target = $region25
    $region24: #{_forward_impl.1} parent=1 // pred_region
      _
    $region25: #{_forward_impl.1} parent=1 // pred_fallthru
      _
    // Predicated region
    $region26: #{_forward_impl.1} parent=1 // pred_check
      _
    $region27: #{_forward_impl.1} parent=1 // pred_check_branch
      %57 = sbr.rel (0) target = $region29
    $region28: #{_forward_impl.1} parent=1 // pred_region
      _
    $region29: #{_forward_impl.1} parent=1 // pred_fallthru
      _
    // Predicated region
    $region30: #{_forward_impl.1} parent=1 // pred_check
      _
    $region31: #{_forward_impl.1} parent=1 // pred_check_branch
      %59 = sbr.rel (0) target = $region33
    $region32: #{_forward_impl.1} parent=1 // pred_region
      %60 = dma.done [#allocation5], 32
    $region33: #{_forward_impl.1} parent=1 // pred_fallthru
      _
    // Predicated region
    $region34: #{_forward_impl.1} parent=1 // pred_check
      _
    $region35: #{_forward_impl.1} parent=1 // pred_check_branch
      %62 = sbr.rel (0) target = $region37
    $region36: #{_forward_impl.1} parent=1 // pred_region
      %63 = dma.done [#allocation7], 16
    $region37: #{_forward_impl.1} parent=1 // pred_fallthru
      _
    // Predicated region
    $region38: #{_forward_impl.1} parent=1 // pred_check
      _
    $region39: #{_forward_impl.1} parent=1 // pred_check_branch
      %65 = sbr.rel (0) target = $region41
    $region40: #{_forward_impl.1} parent=1 // pred_region
      %66 = dma.done [#allocation3], 26624
    $region41: #{_forward_impl.1} parent=1 // pred_fallthru
      _
    %67 = sfence
    %v68 = vld [vmem:[%s4] sm:$0xff]
    %v69 = vld [vmem:[%s4 + $0x8] sm:$0xff]
    %v70 = vld [vmem:[#allocation8] sm:$0x3]
    %v71 = vld [vmem:[#allocation8 + $0x8] sm:$0x3]
    %s72 = scalar_lea.vmem [#allocation8], 16
    %v73 = vld [vmem:[%s72] ss:$8 sm:$0x3]
    %v75 = vlaneseq
    %v76 = vshrl.u32 %v75, 7
    %v77 = vsub.s32 0, %v76
    %v78 = vrot.slane %v73, %v77
    %v79 = vlaneseq
    %v80 = vshrl.u32 %v79, 7
    %v81 = vsub.s32 1, %v80
    %v82 = vrot.slane %v73, %v81
    %vm85 = vcmask 15360
    %v87 = vsel %vm85, %v68, 0
    %v90 = vsel %vm85, %v69, 0
    %vm92 = vcmask 1041408
    %v94 = vsel %vm92, %v70, 0
    %v97 = vsel %vm92, %v71, 0
    %99 = vmatprep.subr.mxu0 0.0
    %100 = vmatpush1.msra.mxu0 0.0
    %101 = vmatprep.subr.mxu0 0.0
    %102 = vmatpush1.msra.mxu0 0.0
    %103 = vmatprep.subr.mxu0 0.0
    %104 = vmatpush1.msra.mxu0 0.0
    %105 = vmatprep.subr.mxu0 0.0
    %106 = vmatpush1.msra.mxu0 0.0
    %107 = vmatprep.subr.mxu0 0.0
    %108 = vmatpush1.msra.mxu0 0.0
    %109 = vmatprep.subr.mxu0 0.0
    %110 = vmatpush1.msra.mxu0 0.0
    %111 = vmatprep.subr.mxu0 0.0
    %112 = vmatpush1.msra.mxu0 0.0
    %113 = vmatprep.subr.mxu0 0.0
    %114 = vmatpush1.msra.mxu0 0.0
    %115 = vmatprep.subr.mxu0 0.0
    %116 = vmatpush1.msra.mxu0 0.0
    %117 = vmatprep.subr.mxu0 0.0
    %118 = vmatpush1.msra.mxu0 0.0
    %119 = vmatprep.subr.mxu0 0.0
    %120 = vmatpush1.msra.mxu0 0.0
    %121 = vmatprep.subr.mxu0 0.0
    %122 = vmatpush1.msra.mxu0 0.0
    %123 = vmatprep.subr.mxu0 0.0
    %124 = vmatpush1.msra.mxu0 0.0
    %125 = vmatprep.subr.mxu0 0.0
    %126 = vmatpush1.msra.mxu0 0.0
    %127 = vmatprep.subr.mxu0 0.0
    %128 = vmatpush1.msra.mxu0 0.0
    %129 = vmatprep.subr.mxu0 %v97
    %130 = vmatpush1.msra.mxu0 %v94
    %131 = vmatprep.subr.mxu0 0.0
    %132 = vmatpush2.msra.mxu0 0.0
    %133 = vmatprep.subr.mxu0 0.0
    %134 = vmatpush2.msra.mxu0 0.0
    %135 = vmatprep.subr.mxu0 0.0
    %136 = vmatpush2.msra.mxu0 0.0
    %137 = vmatprep.subr.mxu0 0.0
    %138 = vmatpush2.msra.mxu0 0.0
    %139 = vmatprep.subr.mxu0 0.0
    %140 = vmatpush2.msra.mxu0 0.0
    %141 = vmatprep.subr.mxu0 0.0
    %142 = vmatpush2.msra.mxu0 0.0
    %143 = vmatprep.subr.mxu0 0.0
    %144 = vmatpush2.msra.mxu0 0.0
    %145 = vmatprep.subr.mxu0 0.0
    %146 = vmatpush2.msra.mxu0 0.0
    %147 = vmatprep.subr.mxu0 0.0
    %148 = vmatpush2.msra.mxu0 0.0
    %149 = vmatprep.subr.mxu0 0.0
    %150 = vmatpush2.msra.mxu0 0.0
    %151 = vmatprep.subr.mxu0 0.0
    %152 = vmatpush2.msra.mxu0 0.0
    %153 = vmatprep.subr.mxu0 0.0
    %154 = vmatpush2.msra.mxu0 0.0
    %155 = vmatprep.subr.mxu0 0.0
    %156 = vmatpush2.msra.mxu0 0.0
    %157 = vmatprep.subr.mxu0 0.0
    %158 = vmatpush2.msra.mxu0 0.0
    %159 = vmatprep.subr.mxu0 0.0
    %160 = vmatpush2.msra.mxu0 0.0
    %161 = vmatprep.subr.mxu0 0.0
    %162 = vmatpush2.msra.mxu0 0.0
    %163 = vmatprep.mubr.f32.mxu0 0.0
    %164 = vmatmul.mubr.f32.gmra.mxu0 %v87
    %v165 = vpop.f32.mrf.mxu0
    %v166 = vadd.f32 %v78, %v165
    %v167 = vpop.f32.mrf.mxu0
    %v168 = vadd.f32 %v82, %v167
    %169 = vmatprep.mubr.f32.mxu0 0.0
    %170 = vmatmul.mubr.f32.gmra.mxu0 %v90
    %v171 = vpop.f32.mrf.mxu0
    %v172 = vadd.f32 %v78, %v171
    %v173 = vpop.f32.mrf.mxu0
    %v174 = vadd.f32 %v82, %v173
    %175 = vdwg.mxu0
    %v176 = vmax.f32 %v166, 0.0
    %v177 = vmax.f32 %v168, 0.0
    %v178 = vmax.f32 %v172, 0.0
    %v179 = vmax.f32 %v174, 0.0
    %v180 = vld [vmem:[#allocation8 + $0x20] sm:$0xff]
    %v181 = vld [vmem:[#allocation8 + $0x30] sm:$0xff]
    %v182 = vld [vmem:[#allocation8 + $0x40] sm:$0xff]
    %v183 = vld [vmem:[#allocation8 + $0x50] sm:$0xff]
    %v184 = vld [vmem:[#allocation8 + $0x60] sm:$0xff]
    %v185 = vld [vmem:[#allocation8 + $0x70] sm:$0xff]
    %v186 = vld [vmem:[#allocation8 + $0x80] sm:$0xff]
    %v187 = vld [vmem:[#allocation8 + $0x90] sm:$0xff]
    %v188 = vld [vmem:[#allocation8 + $0xa0] sm:$0xff]
    %v189 = vld [vmem:[#allocation8 + $0xb0] sm:$0xff]
    %v190 = vld [vmem:[#allocation8 + $0xc0] sm:$0xff]
    %v191 = vld [vmem:[#allocation8 + $0xd0] sm:$0xff]
    %v192 = vld [vmem:[#allocation8 + $0xe0] sm:$0xff]
    %v193 = vld [vmem:[#allocation8 + $0xf0] sm:$0xff]
    %v194 = vld [vmem:[#allocation8 + $0x100] sm:$0xff]
    %v195 = vld [vmem:[#allocation8 + $0x110] sm:$0xff]
    %v196 = vld [vmem:[#allocation8 + $0x120] sm:$0xff]
    %v197 = vld [vmem:[#allocation8 + $0x130] sm:$0xff]
    %v198 = vld [vmem:[#allocation8 + $0x140] sm:$0xff]
    %v199 = vld [vmem:[#allocation8 + $0x150] sm:$0xff]
    %v200 = vld [vmem:[#allocation8 + $0x160] sm:$0xff]
    %v201 = vld [vmem:[#allocation8 + $0x170] sm:$0xff]
    %v202 = vld [vmem:[#allocation8 + $0x180] sm:$0xff]
    %v203 = vld [vmem:[#allocation8 + $0x190] sm:$0xff]
    %v204 = vld [vmem:[#allocation8 + $0x1a0] sm:$0xff]
    %v205 = vld [vmem:[#allocation8 + $0x1b0] sm:$0xff]
    %v206 = vld [vmem:[#allocation8 + $0x1c0] sm:$0xff]
    %v207 = vld [vmem:[#allocation8 + $0x1d0] sm:$0xff]
    %v208 = vld [vmem:[#allocation8 + $0x1e0] sm:$0xff]
    %v209 = vld [vmem:[#allocation8 + $0x1f0] sm:$0xff]
    %v210 = vld [vmem:[#allocation8 + $0x200] sm:$0xff]
    %v211 = vld [vmem:[#allocation8 + $0x210] sm:$0xff]
    %v212 = vld [vmem:[#allocation8 + $0x220] ss:$0 sm:$0xff]
    %213 = vmatprep.subr.mxu0 0.0
    %214 = vmatpush1.msra.mxu0 %v195
    %215 = vmatprep.subr.mxu0 0.0
    %216 = vmatpush1.msra.mxu0 %v194
    %217 = vmatprep.subr.mxu0 0.0
    %218 = vmatpush1.msra.mxu0 %v193
    %219 = vmatprep.subr.mxu0 0.0
    %220 = vmatpush1.msra.mxu0 %v192
    %221 = vmatprep.subr.mxu0 0.0
    %222 = vmatpush1.msra.mxu0 %v191
    %223 = vmatprep.subr.mxu0 0.0
    %224 = vmatpush1.msra.mxu0 %v190
    %225 = vmatprep.subr.mxu0 0.0
    %226 = vmatpush1.msra.mxu0 %v189
    %227 = vmatprep.subr.mxu0 0.0
    %228 = vmatpush1.msra.mxu0 %v188
    %229 = vmatprep.subr.mxu0 0.0
    %230 = vmatpush1.msra.mxu0 %v187
    %231 = vmatprep.subr.mxu0 0.0
    %232 = vmatpush1.msra.mxu0 %v186
    %233 = vmatprep.subr.mxu0 0.0
    %234 = vmatpush1.msra.mxu0 %v185
    %235 = vmatprep.subr.mxu0 0.0
    %236 = vmatpush1.msra.mxu0 %v184
    %237 = vmatprep.subr.mxu0 0.0
    %238 = vmatpush1.msra.mxu0 %v183
    %239 = vmatprep.subr.mxu0 0.0
    %240 = vmatpush1.msra.mxu0 %v182
    %241 = vmatprep.subr.mxu0 0.0
    %242 = vmatpush1.msra.mxu0 %v181
    %243 = vmatprep.subr.mxu0 0.0
    %244 = vmatpush1.msra.mxu0 %v180
    %245 = vmatprep.subr.mxu0 0.0
    %246 = vmatpush2.msra.mxu0 %v211
    %247 = vmatprep.subr.mxu0 0.0
    %248 = vmatpush2.msra.mxu0 %v210
    %249 = vmatprep.subr.mxu0 0.0
    %250 = vmatpush2.msra.mxu0 %v209
    %251 = vmatprep.subr.mxu0 0.0
    %252 = vmatpush2.msra.mxu0 %v208
    %253 = vmatprep.subr.mxu0 0.0
    %254 = vmatpush2.msra.mxu0 %v207
    %255 = vmatprep.subr.mxu0 0.0
    %256 = vmatpush2.msra.mxu0 %v206
    %257 = vmatprep.subr.mxu0 0.0
    %258 = vmatpush2.msra.mxu0 %v205
    %259 = vmatprep.subr.mxu0 0.0
    %260 = vmatpush2.msra.mxu0 %v204
    %261 = vmatprep.subr.mxu0 0.0
    %262 = vmatpush2.msra.mxu0 %v203
    %263 = vmatprep.subr.mxu0 0.0
    %264 = vmatpush2.msra.mxu0 %v202
    %265 = vmatprep.subr.mxu0 0.0
    %266 = vmatpush2.msra.mxu0 %v201
    %267 = vmatprep.subr.mxu0 0.0
    %268 = vmatpush2.msra.mxu0 %v200
    %269 = vmatprep.subr.mxu0 0.0
    %270 = vmatpush2.msra.mxu0 %v199
    %271 = vmatprep.subr.mxu0 0.0
    %272 = vmatpush2.msra.mxu0 %v198
    %273 = vmatprep.subr.mxu0 0.0
    %274 = vmatpush2.msra.mxu0 %v197
    %275 = vmatprep.subr.mxu0 0.0
    %276 = vmatpush2.msra.mxu0 %v196
    %277 = vmatprep.mubr.f32.mxu0 %v177
    %278 = vmatmul.mubr.f32.gmra.mxu0 %v176
    %v279 = vpop.f32.mrf.mxu0
    %v280 = vadd.f32 %v212, %v279
    %v281 = vpop.f32.mrf.mxu0
    %282 = vmatprep.mubr.f32.mxu0 %v179
    %283 = vmatmul.mubr.f32.gmra.mxu0 %v178
    %v284 = vpop.f32.mrf.mxu0
    %v285 = vadd.f32 %v212, %v284
    %v286 = vpop.f32.mrf.mxu0
    %287 = vdwg.mxu0
    %v288 = vld [vmem:[%s6] sm:$0xff]
    %v289 = vld [vmem:[%s6 + $0x8] sm:$0xff]
    %v290 = vmul.f32 %v280, 0.5
    %v291 = vmul.f32 %v285, 0.5
    %v292 = vmul.f32 %v290, 1.442695
    %v293 = vpow.pop %v292
    %v294 = vmul.f32 %v291, 1.442695
    %v295 = vpow.pop %v294
    %298 = vrot.lane.b32.xlu0 %v293, 96
    %v299 = vpop.permute.xlu0 %298
    %300 = vrot.lane.b32.xlu0 %v295, 96
    %v301 = vpop.permute.xlu0 %300
    %v304 = vmul.f32 %v288, %v299
    %v305 = vmul.f32 %v289, %v301
    %v306 = vadd.f32 %v280, %v304
    %v307 = vadd.f32 %v285, %v305
    %v308 = vld [vmem:[%s5] sm:$0xff]
    %v309 = vld [vmem:[%s5 + $0x8] sm:$0xff]
    %s310 = sld [smem:[#allocation2]]
    %s311 = sld [smem:[#allocation2 + $0x1]]
    %s312 = sld [smem:[#allocation2 + $0x2]]
    %v313 = vstv %s310
    %v314 = vmul.f32 %v313, %v308
    %v315 = vmul.f32 %v313, %v309
    %v316 = vstv %s311
    %v317 = vmul.f32 %v316, %v308
    %v318 = vmul.f32 %v316, %v309
    %321 = vrot.lane.b32.xlu0 %v317, 112
    %v322 = vpop.permute.xlu0 %321
    %323 = vrot.lane.b32.xlu0 %v318, 112
    %v324 = vpop.permute.xlu0 %323
    %v327 = vadd.f32 %v314, %v322
    %v328 = vadd.f32 %v315, %v324
    %v329 = vstv %s312
    %v330 = vmul.f32 %v329, %v308
    %v331 = vmul.f32 %v329, %v309
    %334 = vrot.lane.b32.xlu0 %v330, 96
    %v335 = vpop.permute.xlu0 %334
    %336 = vrot.lane.b32.xlu0 %v331, 96
    %v337 = vpop.permute.xlu0 %336
    %v340 = vadd.f32 %v327, %v335
    %v341 = vadd.f32 %v328, %v337
    %s342 = sld [smem:[#allocation6]]
    %v343 = vxor.u32 %v340, 2147483648
    %v344 = vxor.u32 %v341, 2147483648
    %v345 = vmul.f32 %v343, 1.442695
    %v346 = vpow.pop %v345
    %v347 = vmul.f32 %v344, 1.442695
    %v348 = vpow.pop %v347
    %v349 = vadd.f32 %v346, 1.0
    %v350 = vadd.f32 %v348, 1.0
    %v351 = vrcp.pop %v349
    %v352 = vmul.f32 1.0, %v351
    %v353 = vrcp.pop %v350
    %v354 = vmul.f32 1.0, %v353
    %v355 = vstv %s342
    %v356 = vmul.f32 %v355, %v352
    %v357 = vmul.f32 %v355, %v354
    %v358 = vadd.f32 %v356, 0.0
    %v359 = vadd.f32 %v357, 0.0
    %v360 = vmax.f32 %v327, 0.0
    %v361 = vmax.f32 %v328, 0.0
    %vm362 = vcmask 130048
    %v363 = vsel %vm362, %v360, 0.0
    %v364 = vsel %vm362, %v361, 0.0
    %v365 = vadd.f32 %v363, %v364
    %366 = vadd.xlane.f32.xlu0 %v365
    %v367 = vpop.xlane.xlu0 %366
    %v368 = vrot.slane %v367, 4
    %v369 = vadd.f32 %v367, %v368
    %v370 = vrot.slane %v369, 2
    %v371 = vadd.f32 %v369, %v370
    %v372 = vrot.slane %v371, 1
    %v373 = vadd.f32 %v371, %v372
    %s374 = vtos %v373
    %s375 = sadd.f32 %s374, 0.0
    %s376 = sld [smem:[#allocation2 + $0x80]]
    %s377 = sld [smem:[#allocation2 + $0x81]]
    %s378 = sld [smem:[#allocation2 + $0x82]]
    %v379 = vstv %s376
    %v380 = vmul.f32 %v379, %v308
    %v381 = vmul.f32 %v379, %v309
    %v382 = vstv %s377
    %v383 = vmul.f32 %v382, %v308
    %v384 = vmul.f32 %v382, %v309
    %387 = vrot.lane.b32.xlu0 %v383, 112
    %v388 = vpop.permute.xlu0 %387
    %389 = vrot.lane.b32.xlu0 %v384, 112
    %v390 = vpop.permute.xlu0 %389
    %v393 = vadd.f32 %v380, %v388
    %v394 = vadd.f32 %v381, %v390
    %v395 = vstv %s378
    %v396 = vmul.f32 %v395, %v308
    %v397 = vmul.f32 %v395, %v309
    %400 = vrot.lane.b32.xlu0 %v396, 96
    %v401 = vpop.permute.xlu0 %400
    %402 = vrot.lane.b32.xlu0 %v397, 96
    %v403 = vpop.permute.xlu0 %402
    %v406 = vadd.f32 %v393, %v401
    %v407 = vadd.f32 %v394, %v403
    %s408 = sld [smem:[#allocation6 + $0x1]]
    %v409 = vxor.u32 %v406, 2147483648
    %v410 = vxor.u32 %v407, 2147483648
    %v411 = vmul.f32 %v409, 1.442695
    %v412 = vpow.pop %v411
    %v413 = vmul.f32 %v410, 1.442695
    %v414 = vpow.pop %v413
    %v415 = vadd.f32 %v412, 1.0
    %v416 = vadd.f32 %v414, 1.0
    %v417 = vrcp.pop %v415
    %v418 = vmul.f32 1.0, %v417
    %v419 = vrcp.pop %v416
    %v420 = vmul.f32 1.0, %v419
    %v421 = vstv %s408
    %v422 = vmul.f32 %v421, %v418
    %v423 = vmul.f32 %v421, %v420
    %426 = vrot.lane.b32.xlu0 %v422, 80
    %v427 = vpop.permute.xlu0 %426
    %428 = vrot.lane.b32.xlu0 %v423, 80
    %v429 = vpop.permute.xlu0 %428
    %v432 = vadd.f32 %v358, %v427
    %v433 = vadd.f32 %v359, %v429
    %v434 = vmax.f32 %v393, 0.0
    %v435 = vmax.f32 %v394, 0.0
    %438 = vrot.lane.b32.xlu0 %v434, 80
    %v439 = vpop.permute.xlu0 %438
    %440 = vrot.lane.b32.xlu0 %v435, 80
    %v441 = vpop.permute.xlu0 %440
    %v444 = vsel %vm362, %v439, 0.0
    %v445 = vsel %vm362, %v441, 0.0
    %v446 = vadd.f32 %v444, %v445
    %447 = vadd.xlane.f32.xlu0 %v446
    %v448 = vpop.xlane.xlu0 %447
    %v449 = vrot.slane %v448, 4
    %v450 = vadd.f32 %v448, %v449
    %v451 = vrot.slane %v450, 2
    %v452 = vadd.f32 %v450, %v451
    %v453 = vrot.slane %v452, 1
    %v454 = vadd.f32 %v452, %v453
    %s455 = vtos %v454
    %s456 = sadd.f32 %s375, %s455
    %v457 = vrcp.pop 256.0
    %s458 = vtos %v457
    %s459 = smul.f32 %s456, %s458
    %v460 = vld [vmem:[%s3] sm:$0xff]
    %v461 = vld [vmem:[%s3 + $0x8] sm:$0xff]
    %464 = vrot.lane.b32.xlu0 %v306, 32
    %v465 = vpop.permute.xlu0 %464
    %466 = vrot.lane.b32.xlu0 %v307, 32
    %v467 = vpop.permute.xlu0 %466
    %vm470 = vcmask 261120
    %v471 = vsel %vm470, %v460, %v465
    %v472 = vsel %vm470, %v461, %v467
    %v473 = vmul.f32 %v471, %v471
    %v474 = vmul.f32 %v472, %v472
    %vm475 = vcmask 523264
    %v476 = vsel %vm475, %v473, 0.0
    %477 = vadd.xlane.f32.xlu0 %v476
    %v478 = vpop.xlane.xlu0 %477
    %v479 = vsel %vm475, %v474, 0.0
    %480 = vadd.xlane.f32.xlu0 %v479
    %v481 = vpop.xlane.xlu0 %480
    %v482 = vrsqrt.pop %v478
    %v483 = vmul.f32 %v478, %v482
    %vm484 = vcmp.eq.f32.partialorder %v478, inf
    %v485 = vsel %vm484, %v478, %v483
    %vm486 = vcmp.eq.f32.partialorder %v478, 0.0
    %v487 = vand.u32 %v478, 2147483648
    %v488 = vsel %vm486, %v487, %v485
    %v489 = vrsqrt.pop %v481
    %v490 = vmul.f32 %v481, %v489
    %vm491 = vcmp.eq.f32.partialorder %v481, inf
    %v492 = vsel %vm491, %v481, %v490
    %vm493 = vcmp.eq.f32.partialorder %v481, 0.0
    %v494 = vand.u32 %v481, 2147483648
    %v495 = vsel %vm493, %v494, %v492
    %v496 = vadd.f32 %v488, 1e-08
    %v497 = vadd.f32 %v495, 1e-08
    %v498 = vrcp.pop %v496
    %v499 = vmul.f32 1.0, %v498
    %v500 = vrcp.pop %v497
    %v501 = vmul.f32 1.0, %v500
    %v502 = vmul.f32 %v471, %v499
    %v503 = vmul.f32 %v472, %v501
    %v505 = vsel %vm475, %v502, 0
    %v508 = vsel %vm475, %v503, 0
    %510 = vmatprep.subr.mxu0 0.0
    %511 = vmatpush1.xpose.msra.mxu0 0.0
    %512 = vmatprep.subr.mxu0 0.0
    %513 = vmatpush1.xpose.msra.mxu0 0.0
    %514 = vmatprep.subr.mxu0 0.0
    %515 = vmatpush1.xpose.msra.mxu0 0.0
    %516 = vmatprep.subr.mxu0 0.0
    %517 = vmatpush1.xpose.msra.mxu0 0.0
    %518 = vmatprep.subr.mxu0 0.0
    %519 = vmatpush1.xpose.msra.mxu0 0.0
    %520 = vmatprep.subr.mxu0 0.0
    %521 = vmatpush1.xpose.msra.mxu0 0.0
    %522 = vmatprep.subr.mxu0 0.0
    %523 = vmatpush1.xpose.msra.mxu0 0.0
    %524 = vmatprep.subr.mxu0 0.0
    %525 = vmatpush1.xpose.msra.mxu0 0.0
    %526 = vmatprep.subr.mxu0 0.0
    %527 = vmatpush1.xpose.msra.mxu0 0.0
    %528 = vmatprep.subr.mxu0 0.0
    %529 = vmatpush1.xpose.msra.mxu0 0.0
    %530 = vmatprep.subr.mxu0 0.0
    %531 = vmatpush1.xpose.msra.mxu0 0.0
    %532 = vmatprep.subr.mxu0 0.0
    %533 = vmatpush1.xpose.msra.mxu0 0.0
    %534 = vmatprep.subr.mxu0 0.0
    %535 = vmatpush1.xpose.msra.mxu0 0.0
    %536 = vmatprep.subr.mxu0 0.0
    %537 = vmatpush1.xpose.msra.mxu0 0.0
    %538 = vmatprep.subr.mxu0 0.0
    %539 = vmatpush1.xpose.msra.mxu0 %v508
    %540 = vmatprep.subr.mxu0 0.0
    %541 = vmatpush1.xpose.msra.mxu0 %v505
    %542 = vmatprep.subr.mxu0 0.0
    %543 = vmatpush2.xpose.msra.mxu0 0.0
    %544 = vmatprep.subr.mxu0 0.0
    %545 = vmatpush2.xpose.msra.mxu0 0.0
    %546 = vmatprep.subr.mxu0 0.0
    %547 = vmatpush2.xpose.msra.mxu0 0.0
    %548 = vmatprep.subr.mxu0 0.0
    %549 = vmatpush2.xpose.msra.mxu0 0.0
    %550 = vmatprep.subr.mxu0 0.0
    %551 = vmatpush2.xpose.msra.mxu0 0.0
    %552 = vmatprep.subr.mxu0 0.0
    %553 = vmatpush2.xpose.msra.mxu0 0.0
    %554 = vmatprep.subr.mxu0 0.0
    %555 = vmatpush2.xpose.msra.mxu0 0.0
    %556 = vmatprep.subr.mxu0 0.0
    %557 = vmatpush2.xpose.msra.mxu0 0.0
    %558 = vmatprep.subr.mxu0 0.0
    %559 = vmatpush2.xpose.msra.mxu0 0.0
    %560 = vmatprep.subr.mxu0 0.0
    %561 = vmatpush2.xpose.msra.mxu0 0.0
    %562 = vmatprep.subr.mxu0 0.0
    %563 = vmatpush2.xpose.msra.mxu0 0.0
    %564 = vmatprep.subr.mxu0 0.0
    %565 = vmatpush2.xpose.msra.mxu0 0.0
    %566 = vmatprep.subr.mxu0 0.0
    %567 = vmatpush2.xpose.msra.mxu0 0.0
    %568 = vmatprep.subr.mxu0 0.0
    %569 = vmatpush2.xpose.msra.mxu0 0.0
    %570 = vmatprep.subr.mxu0 0.0
    %571 = vmatpush2.xpose.msra.mxu0 0.0
    %572 = vmatprep.subr.mxu0 0.0
    %573 = vmatpush2.xpose.msra.mxu0 0.0
    %574 = vmatprep.mubr.f32.mxu0 0.0
    %575 = vmatmul.mubr.f32.gmra.mxu0 %v505
    %v576 = vpop.f32.mrf.mxu0
    %v577 = vadd.f32 0.0, %v576
    %v578 = vpop.f32.mrf.mxu0
    %579 = vmatprep.mubr.f32.mxu0 0.0
    %580 = vmatmul.mubr.f32.gmra.mxu0 %v508
    %v581 = vpop.f32.mrf.mxu0
    %v582 = vadd.f32 0.0, %v581
    %v583 = vpop.f32.mrf.mxu0
    %584 = vdwg.mxu0
    %v585 = vmul.f32 %v577, %v432
    %v586 = vmul.f32 %v582, %v433
    %v587 = vsel %vm362, %v585, 0.0
    %588 = vadd.xlane.f32.xlu0 %v587
    %v589 = vpop.xlane.xlu0 %588
    %v590 = vsel %vm362, %v586, 0.0
    %591 = vadd.xlane.f32.xlu0 %v590
    %v592 = vpop.xlane.xlu0 %591
    %v593 = vmul.f32 %v589, 1.00001
    %v594 = vmul.f32 %v592, 1.00001
    %v595 = vlog2.pop %v593
    %v596 = vmul.f32 %v595, 0.6931472
    %v597 = vlog2.pop %v594
    %v598 = vmul.f32 %v597, 0.6931472
    %vm599 = vcmask 7168
    %v600 = vsel %vm599, %v596, 0.0
    %v601 = vsel %vm599, %v598, 0.0
    %v602 = vadd.f32 %v600, %v601
    %603 = vadd.xlane.f32.xlu0 %v602
    %v604 = vpop.xlane.xlu0 %603
    %v605 = vrot.slane %v604, 4
    %v606 = vadd.f32 %v604, %v605
    %v607 = vrot.slane %v606, 2
    %v608 = vadd.f32 %v606, %v607
    %v609 = vrot.slane %v608, 1
    %v610 = vadd.f32 %v608, %v609
    %s611 = vtos %v610
    %v612 = vrcp.pop 16.0
    %s613 = vtos %v612
    %s614 = smul.f32 %s611, %s613
    %v616 = vsel %vm362, %v585, 0
    %v619 = vsel %vm362, %v586, 0
    %621 = vmatprep.subr.mxu0 0.0
    %622 = vmatpush1.msra.mxu0 0.0
    %623 = vmatprep.subr.mxu0 0.0
    %624 = vmatpush1.msra.mxu0 0.0
    %625 = vmatprep.subr.mxu0 0.0
    %626 = vmatpush1.msra.mxu0 0.0
    %627 = vmatprep.subr.mxu0 0.0
    %628 = vmatpush1.msra.mxu0 0.0
    %629 = vmatprep.subr.mxu0 0.0
    %630 = vmatpush1.msra.mxu0 0.0
    %631 = vmatprep.subr.mxu0 0.0
    %632 = vmatpush1.msra.mxu0 0.0
    %633 = vmatprep.subr.mxu0 0.0
    %634 = vmatpush1.msra.mxu0 0.0
    %635 = vmatprep.subr.mxu0 0.0
    %636 = vmatpush1.msra.mxu0 0.0
    %637 = vmatprep.subr.mxu0 0.0
    %638 = vmatpush1.msra.mxu0 0.0
    %639 = vmatprep.subr.mxu0 0.0
    %640 = vmatpush1.msra.mxu0 0.0
    %641 = vmatprep.subr.mxu0 0.0
    %642 = vmatpush1.msra.mxu0 0.0
    %643 = vmatprep.subr.mxu0 0.0
    %644 = vmatpush1.msra.mxu0 0.0
    %645 = vmatprep.subr.mxu0 0.0
    %646 = vmatpush1.msra.mxu0 0.0
    %647 = vmatprep.subr.mxu0 0.0
    %648 = vmatpush1.msra.mxu0 0.0
    %649 = vmatprep.subr.mxu0 0.0
    %650 = vmatpush1.msra.mxu0 %v472
    %651 = vmatprep.subr.mxu0 0.0
    %652 = vmatpush1.msra.mxu0 %v471
    %653 = vmatprep.subr.mxu0 0.0
    %654 = vmatpush2.msra.mxu0 0.0
    %655 = vmatprep.subr.mxu0 0.0
    %656 = vmatpush2.msra.mxu0 0.0
    %657 = vmatprep.subr.mxu0 0.0
    %658 = vmatpush2.msra.mxu0 0.0
    %659 = vmatprep.subr.mxu0 0.0
    %660 = vmatpush2.msra.mxu0 0.0
    %661 = vmatprep.subr.mxu0 0.0
    %662 = vmatpush2.msra.mxu0 0.0
    %663 = vmatprep.subr.mxu0 0.0
    %664 = vmatpush2.msra.mxu0 0.0
    %665 = vmatprep.subr.mxu0 0.0
    %666 = vmatpush2.msra.mxu0 0.0
    %667 = vmatprep.subr.mxu0 0.0
    %668 = vmatpush2.msra.mxu0 0.0
    %669 = vmatprep.subr.mxu0 0.0
    %670 = vmatpush2.msra.mxu0 0.0
    %671 = vmatprep.subr.mxu0 0.0
    %672 = vmatpush2.msra.mxu0 0.0
    %673 = vmatprep.subr.mxu0 0.0
    %674 = vmatpush2.msra.mxu0 0.0
    %675 = vmatprep.subr.mxu0 0.0
    %676 = vmatpush2.msra.mxu0 0.0
    %677 = vmatprep.subr.mxu0 0.0
    %678 = vmatpush2.msra.mxu0 0.0
    %679 = vmatprep.subr.mxu0 0.0
    %680 = vmatpush2.msra.mxu0 0.0
    %681 = vmatprep.subr.mxu0 0.0
    %682 = vmatpush2.msra.mxu0 0.0
    %683 = vmatprep.subr.mxu0 0.0
    %684 = vmatpush2.msra.mxu0 0.0
    %685 = vmatprep.mubr.f32.mxu0 0.0
    %686 = vmatmul.mubr.f32.gmra.mxu0 %v616
    %v687 = vpop.f32.mrf.mxu0
    %v688 = vadd.f32 0.0, %v687
    %v689 = vpop.f32.mrf.mxu0
    %690 = vmatprep.mubr.f32.mxu0 0.0
    %691 = vmatmul.mubr.f32.gmra.mxu0 %v619
    %v692 = vpop.f32.mrf.mxu0
    %v693 = vadd.f32 0.0, %v692
    %v694 = vpop.f32.mrf.mxu0
    %695 = vdwg.mxu0
    %v696 = vld [vmem:[#allocation8 + $0x230] sm:$0xff]
    %v697 = vld [vmem:[#allocation8 + $0x240] sm:$0xff]
    %v698 = vld [vmem:[#allocation8 + $0x250] sm:$0xff]
    %v699 = vld [vmem:[#allocation8 + $0x260] sm:$0xff]
    %v700 = vld [vmem:[#allocation8 + $0x270] sm:$0xff]
    %v701 = vld [vmem:[#allocation8 + $0x280] sm:$0xff]
    %v702 = vld [vmem:[#allocation8 + $0x290] sm:$0xff]
    %v703 = vld [vmem:[#allocation8 + $0x2a0] sm:$0xff]
    %v704 = vld [vmem:[#allocation8 + $0x2b0] ss:$0 sm:$0xff]
    %v706 = vsel %vm475, %v688, 0
    %v709 = vsel %vm475, %v693, 0
    %711 = vmatprep.subr.mxu0 0.0
    %712 = vmatpush1.msra.mxu0 0.0
    %713 = vmatprep.subr.mxu0 0.0
    %714 = vmatpush1.msra.mxu0 0.0
    %715 = vmatprep.subr.mxu0 0.0
    %716 = vmatpush1.msra.mxu0 0.0
    %717 = vmatprep.subr.mxu0 0.0
    %718 = vmatpush1.msra.mxu0 0.0
    %719 = vmatprep.subr.mxu0 0.0
    %720 = vmatpush1.msra.mxu0 0.0
    %721 = vmatprep.subr.mxu0 0.0
    %722 = vmatpush1.msra.mxu0 0.0
    %723 = vmatprep.subr.mxu0 0.0
    %724 = vmatpush1.msra.mxu0 0.0
    %725 = vmatprep.subr.mxu0 0.0
    %726 = vmatpush1.msra.mxu0 0.0
    %727 = vmatprep.subr.mxu0 0.0
    %728 = vmatpush1.msra.mxu0 %v703
    %729 = vmatprep.subr.mxu0 0.0
    %730 = vmatpush1.msra.mxu0 %v702
    %731 = vmatprep.subr.mxu0 0.0
    %732 = vmatpush1.msra.mxu0 %v701
    %733 = vmatprep.subr.mxu0 0.0
    %734 = vmatpush1.msra.mxu0 %v700
    %735 = vmatprep.subr.mxu0 0.0
    %736 = vmatpush1.msra.mxu0 %v699
    %737 = vmatprep.subr.mxu0 0.0
    %738 = vmatpush1.msra.mxu0 %v698
    %739 = vmatprep.subr.mxu0 0.0
    %740 = vmatpush1.msra.mxu0 %v697
    %741 = vmatprep.subr.mxu0 0.0
    %742 = vmatpush1.msra.mxu0 %v696
    %743 = vmatprep.subr.mxu0 0.0
    %744 = vmatpush2.msra.mxu0 0.0
    %745 = vmatprep.subr.mxu0 0.0
    %746 = vmatpush2.msra.mxu0 0.0
    %747 = vmatprep.subr.mxu0 0.0
    %748 = vmatpush2.msra.mxu0 0.0
    %749 = vmatprep.subr.mxu0 0.0
    %750 = vmatpush2.msra.mxu0 0.0
    %751 = vmatprep.subr.mxu0 0.0
    %752 = vmatpush2.msra.mxu0 0.0
    %753 = vmatprep.subr.mxu0 0.0
    %754 = vmatpush2.msra.mxu0 0.0
    %755 = vmatprep.subr.mxu0 0.0
    %756 = vmatpush2.msra.mxu0 0.0
    %757 = vmatprep.subr.mxu0 0.0
    %758 = vmatpush2.msra.mxu0 0.0
    %759 = vmatprep.subr.mxu0 0.0
    %760 = vmatpush2.msra.mxu0 0.0
    %761 = vmatprep.subr.mxu0 0.0
    %762 = vmatpush2.msra.mxu0 0.0
    %763 = vmatprep.subr.mxu0 0.0
    %764 = vmatpush2.msra.mxu0 0.0
    %765 = vmatprep.subr.mxu0 0.0
    %766 = vmatpush2.msra.mxu0 0.0
    %767 = vmatprep.subr.mxu0 0.0
    %768 = vmatpush2.msra.mxu0 0.0
    %769 = vmatprep.subr.mxu0 0.0
    %770 = vmatpush2.msra.mxu0 0.0
    %771 = vmatprep.subr.mxu0 0.0
    %772 = vmatpush2.msra.mxu0 0.0
    %773 = vmatprep.subr.mxu0 0.0
    %774 = vmatpush2.msra.mxu0 0.0
    %775 = vmatprep.mubr.f32.mxu0 0.0
    %776 = vmatmul.mubr.f32.gmra.mxu0 %v706
    %v777 = vpop.f32.mrf.mxu0
    %v778 = vadd.f32 %v704, %v777
    %v779 = vpop.f32.mrf.mxu0
    %780 = vmatprep.mubr.f32.mxu0 0.0
    %781 = vmatmul.mubr.f32.gmra.mxu0 %v709
    %v782 = vpop.f32.mrf.mxu0
    %v783 = vadd.f32 %v704, %v782
    %v784 = vpop.f32.mrf.mxu0
    %785 = vdwg.mxu0
    %v786 = vmax.f32 %v778, 0.0
    %v787 = vmax.f32 %v783, 0.0
    %788 = vmatprep.subr.mxu0 0.0
    %789 = vmatpush1.msra.mxu0 0.0
    %790 = vmatprep.subr.mxu0 0.0
    %791 = vmatpush1.msra.mxu0 0.0
    %792 = vmatprep.subr.mxu0 0.0
    %793 = vmatpush1.msra.mxu0 0.0
    %794 = vmatprep.subr.mxu0 0.0
    %795 = vmatpush1.msra.mxu0 0.0
    %796 = vmatprep.subr.mxu0 0.0
    %797 = vmatpush1.msra.mxu0 0.0
    %798 = vmatprep.subr.mxu0 0.0
    %799 = vmatpush1.msra.mxu0 0.0
    %800 = vmatprep.subr.mxu0 0.0
    %801 = vmatpush1.msra.mxu0 0.0
    %802 = vmatprep.subr.mxu0 0.0
    %803 = vmatpush1.msra.mxu0 0.0
    %804 = vmatprep.subr.mxu0 0.0
    %805 = vmatpush1.msra.mxu0 0.0
    %806 = vmatprep.subr.mxu0 0.0
    %807 = vmatpush1.msra.mxu0 0.0
    %808 = vmatprep.subr.mxu0 0.0
    %809 = vmatpush1.msra.mxu0 0.0
    %810 = vmatprep.subr.mxu0 0.0
    %811 = vmatpush1.msra.mxu0 0.0
    %812 = vmatprep.subr.mxu0 0.0
    %813 = vmatpush1.msra.mxu0 0.0
    %814 = vmatprep.subr.mxu0 0.0
    %815 = vmatpush1.msra.mxu0 0.0
    %816 = vmatprep.subr.mxu0 0.0
    %817 = vmatpush1.msra.mxu0 %v787
    %818 = vmatprep.subr.mxu0 0.0
    %819 = vmatpush1.msra.mxu0 %v786
    %820 = vmatprep.subr.mxu0 0.0
    %821 = vmatpush2.msra.mxu0 0.0
    %822 = vmatprep.subr.mxu0 0.0
    %823 = vmatpush2.msra.mxu0 0.0
    %824 = vmatprep.subr.mxu0 0.0
    %825 = vmatpush2.msra.mxu0 0.0
    %826 = vmatprep.subr.mxu0 0.0
    %827 = vmatpush2.msra.mxu0 0.0
    %828 = vmatprep.subr.mxu0 0.0
    %829 = vmatpush2.msra.mxu0 0.0
    %830 = vmatprep.subr.mxu0 0.0
    %831 = vmatpush2.msra.mxu0 0.0
    %832 = vmatprep.subr.mxu0 0.0
    %833 = vmatpush2.msra.mxu0 0.0
    %834 = vmatprep.subr.mxu0 0.0
    %835 = vmatpush2.msra.mxu0 0.0
    %836 = vmatprep.subr.mxu0 0.0
    %837 = vmatpush2.msra.mxu0 0.0
    %838 = vmatprep.subr.mxu0 0.0
    %839 = vmatpush2.msra.mxu0 0.0
    %840 = vmatprep.subr.mxu0 0.0
    %841 = vmatpush2.msra.mxu0 0.0
    %842 = vmatprep.subr.mxu0 0.0
    %843 = vmatpush2.msra.mxu0 0.0
    %844 = vmatprep.subr.mxu0 0.0
    %845 = vmatpush2.msra.mxu0 0.0
    %846 = vmatprep.subr.mxu0 0.0
    %847 = vmatpush2.msra.mxu0 0.0
    %848 = vmatprep.subr.mxu0 0.0
    %849 = vmatpush2.msra.mxu0 0.0
    %850 = vmatprep.subr.mxu0 0.0
    %851 = vmatpush2.msra.mxu0 0.0
    %852 = vmatprep.mubr.f32.mxu0 0.0
    %853 = vmatmul.mubr.f32.gmra.mxu0 %v616
    %v854 = vpop.f32.mrf.mxu0
    %v855 = vadd.f32 0.0, %v854
    %v856 = vpop.f32.mrf.mxu0
    %857 = vmatprep.mubr.f32.mxu0 0.0
    %858 = vmatmul.mubr.f32.gmra.mxu0 %v619
    %v859 = vpop.f32.mrf.mxu0
    %v860 = vadd.f32 0.0, %v859
    %v861 = vpop.f32.mrf.mxu0
    %862 = vdwg.mxu0
    %v863 = vld [vmem:[#allocation8 + $0x2c0] sm:$0xff]
    %v864 = vld [vmem:[#allocation8 + $0x2d0] sm:$0xff]
    %v865 = vld [vmem:[#allocation8 + $0x2e0] sm:$0xff]
    %v866 = vld [vmem:[#allocation8 + $0x2f0] sm:$0xff]
    %v867 = vld [vmem:[#allocation8 + $0x300] sm:$0xff]
    %v868 = vld [vmem:[#allocation8 + $0x310] sm:$0xff]
    %v869 = vld [vmem:[#allocation8 + $0x320] sm:$0xff]
    %v870 = vld [vmem:[#allocation8 + $0x330] sm:$0xff]
    %v871 = vld [vmem:[#allocation8 + $0x340] ss:$0 sm:$0xff]
    %v873 = vsel %vm475, %v855, 0
    %v876 = vsel %vm475, %v860, 0
    %878 = vmatprep.subr.mxu0 0.0
    %879 = vmatpush1.msra.mxu0 0.0
    %880 = vmatprep.subr.mxu0 0.0
    %881 = vmatpush1.msra.mxu0 0.0
    %882 = vmatprep.subr.mxu0 0.0
    %883 = vmatpush1.msra.mxu0 0.0
    %884 = vmatprep.subr.mxu0 0.0
    %885 = vmatpush1.msra.mxu0 0.0
    %886 = vmatprep.subr.mxu0 0.0
    %887 = vmatpush1.msra.mxu0 0.0
    %888 = vmatprep.subr.mxu0 0.0
    %889 = vmatpush1.msra.mxu0 0.0
    %890 = vmatprep.subr.mxu0 0.0
    %891 = vmatpush1.msra.mxu0 0.0
    %892 = vmatprep.subr.mxu0 0.0
    %893 = vmatpush1.msra.mxu0 0.0
    %894 = vmatprep.subr.mxu0 0.0
    %895 = vmatpush1.msra.mxu0 %v870
    %896 = vmatprep.subr.mxu0 0.0
    %897 = vmatpush1.msra.mxu0 %v869
    %898 = vmatprep.subr.mxu0 0.0
    %899 = vmatpush1.msra.mxu0 %v868
    %900 = vmatprep.subr.mxu0 0.0
    %901 = vmatpush1.msra.mxu0 %v867
    %902 = vmatprep.subr.mxu0 0.0
    %903 = vmatpush1.msra.mxu0 %v866
    %904 = vmatprep.subr.mxu0 0.0
    %905 = vmatpush1.msra.mxu0 %v865
    %906 = vmatprep.subr.mxu0 0.0
    %907 = vmatpush1.msra.mxu0 %v864
    %908 = vmatprep.subr.mxu0 0.0
    %909 = vmatpush1.msra.mxu0 %v863
    %910 = vmatprep.subr.mxu0 0.0
    %911 = vmatpush2.msra.mxu0 0.0
    %912 = vmatprep.subr.mxu0 0.0
    %913 = vmatpush2.msra.mxu0 0.0
    %914 = vmatprep.subr.mxu0 0.0
    %915 = vmatpush2.msra.mxu0 0.0
    %916 = vmatprep.subr.mxu0 0.0
    %917 = vmatpush2.msra.mxu0 0.0
    %918 = vmatprep.subr.mxu0 0.0
    %919 = vmatpush2.msra.mxu0 0.0
    %920 = vmatprep.subr.mxu0 0.0
    %921 = vmatpush2.msra.mxu0 0.0
    %922 = vmatprep.subr.mxu0 0.0
    %923 = vmatpush2.msra.mxu0 0.0
    %924 = vmatprep.subr.mxu0 0.0
    %925 = vmatpush2.msra.mxu0 0.0
    %926 = vmatprep.subr.mxu0 0.0
    %927 = vmatpush2.msra.mxu0 0.0
    %928 = vmatprep.subr.mxu0 0.0
    %929 = vmatpush2.msra.mxu0 0.0
    %930 = vmatprep.subr.mxu0 0.0
    %931 = vmatpush2.msra.mxu0 0.0
    %932 = vmatprep.subr.mxu0 0.0
    %933 = vmatpush2.msra.mxu0 0.0
    %934 = vmatprep.subr.mxu0 0.0
    %935 = vmatpush2.msra.mxu0 0.0
    %936 = vmatprep.subr.mxu0 0.0
    %937 = vmatpush2.msra.mxu0 0.0
    %938 = vmatprep.subr.mxu0 0.0
    %939 = vmatpush2.msra.mxu0 0.0
    %940 = vmatprep.subr.mxu0 0.0
    %941 = vmatpush2.msra.mxu0 0.0
    %942 = vmatprep.mubr.f32.mxu0 0.0
    %943 = vmatmul.mubr.f32.gmra.mxu0 %v873
    %v944 = vpop.f32.mrf.mxu0
    %v945 = vadd.f32 %v871, %v944
    %v946 = vpop.f32.mrf.mxu0
    %947 = vmatprep.mubr.f32.mxu0 0.0
    %948 = vmatmul.mubr.f32.gmra.mxu0 %v876
    %v949 = vpop.f32.mrf.mxu0
    %v950 = vadd.f32 %v871, %v949
    %v951 = vpop.f32.mrf.mxu0
    %952 = vdwg.mxu0
    %955 = vrot.lane.b32.xlu0 %v945, 96
    %v956 = vpop.permute.xlu0 %955
    %957 = vrot.lane.b32.xlu0 %v950, 96
    %v958 = vpop.permute.xlu0 %957
    %v961 = vadd.f32 %v945, %v956
    %v962 = vadd.f32 %v950, %v958
    %v963 = vmul.f32 %v961, 0.5
    %v964 = vmul.f32 %v962, 0.5
    %967 = vrot.lane.b32.xlu0 %v963, 64
    %v968 = vpop.permute.xlu0 %967
    %969 = vrot.lane.b32.xlu0 %v964, 64
    %v970 = vpop.permute.xlu0 %969
    %v973 = vsel %vm475, %v945, %v968
    %v974 = vsel %vm475, %v950, %v970
    %v975 = vld [vmem:[#allocation8 + $0x350] sm:$0xff]
    %v976 = vld [vmem:[#allocation8 + $0x360] sm:$0xff]
    %v977 = vld [vmem:[#allocation8 + $0x370] sm:$0xff]
    %v978 = vld [vmem:[#allocation8 + $0x380] sm:$0xff]
    %v979 = vld [vmem:[#allocation8 + $0x390] sm:$0xff]
    %v980 = vld [vmem:[#allocation8 + $0x3a0] sm:$0xff]
    %v981 = vld [vmem:[#allocation8 + $0x3b0] sm:$0xff]
    %v982 = vld [vmem:[#allocation8 + $0x3c0] sm:$0xff]
    %v983 = vld [vmem:[#allocation8 + $0x3d0] sm:$0xff]
    %v984 = vld [vmem:[#allocation8 + $0x3e0] sm:$0xff]
    %v985 = vld [vmem:[#allocation8 + $0x3f0] sm:$0xff]
    %v986 = vld [vmem:[#allocation8 + $0x400] sm:$0xff]
    %v987 = vld [vmem:[#allocation8 + $0x410] ss:$0 sm:$0xff]
    %vm988 = vcmask 785408
    %v990 = vsel %vm988, %v973, 0
    %v993 = vsel %vm988, %v974, 0
    %995 = vmatprep.subr.mxu0 0.0
    %996 = vmatpush1.msra.mxu0 0.0
    %997 = vmatprep.subr.mxu0 0.0
    %998 = vmatpush1.msra.mxu0 0.0
    %999 = vmatprep.subr.mxu0 0.0
    %1000 = vmatpush1.msra.mxu0 0.0
    %1001 = vmatprep.subr.mxu0 0.0
    %1002 = vmatpush1.msra.mxu0 0.0
    %1003 = vmatprep.subr.mxu0 0.0
    %1004 = vmatpush1.msra.mxu0 %v986
    %1005 = vmatprep.subr.mxu0 0.0
    %1006 = vmatpush1.msra.mxu0 %v985
    %1007 = vmatprep.subr.mxu0 0.0
    %1008 = vmatpush1.msra.mxu0 %v984
    %1009 = vmatprep.subr.mxu0 0.0
    %1010 = vmatpush1.msra.mxu0 %v983
    %1011 = vmatprep.subr.mxu0 0.0
    %1012 = vmatpush1.msra.mxu0 %v982
    %1013 = vmatprep.subr.mxu0 0.0
    %1014 = vmatpush1.msra.mxu0 %v981
    %1015 = vmatprep.subr.mxu0 0.0
    %1016 = vmatpush1.msra.mxu0 %v980
    %1017 = vmatprep.subr.mxu0 0.0
    %1018 = vmatpush1.msra.mxu0 %v979
    %1019 = vmatprep.subr.mxu0 0.0
    %1020 = vmatpush1.msra.mxu0 %v978
    %1021 = vmatprep.subr.mxu0 0.0
    %1022 = vmatpush1.msra.mxu0 %v977
    %1023 = vmatprep.subr.mxu0 0.0
    %1024 = vmatpush1.msra.mxu0 %v976
    %1025 = vmatprep.subr.mxu0 0.0
    %1026 = vmatpush1.msra.mxu0 %v975
    %1027 = vmatprep.subr.mxu0 0.0
    %1028 = vmatpush2.msra.mxu0 0.0
    %1029 = vmatprep.subr.mxu0 0.0
    %1030 = vmatpush2.msra.mxu0 0.0
    %1031 = vmatprep.subr.mxu0 0.0
    %1032 = vmatpush2.msra.mxu0 0.0
    %1033 = vmatprep.subr.mxu0 0.0
    %1034 = vmatpush2.msra.mxu0 0.0
    %1035 = vmatprep.subr.mxu0 0.0
    %1036 = vmatpush2.msra.mxu0 0.0
    %1037 = vmatprep.subr.mxu0 0.0
    %1038 = vmatpush2.msra.mxu0 0.0
    %1039 = vmatprep.subr.mxu0 0.0
    %1040 = vmatpush2.msra.mxu0 0.0
    %1041 = vmatprep.subr.mxu0 0.0
    %1042 = vmatpush2.msra.mxu0 0.0
    %1043 = vmatprep.subr.mxu0 0.0
    %1044 = vmatpush2.msra.mxu0 0.0
    %1045 = vmatprep.subr.mxu0 0.0
    %1046 = vmatpush2.msra.mxu0 0.0
    %1047 = vmatprep.subr.mxu0 0.0
    %1048 = vmatpush2.msra.mxu0 0.0
    %1049 = vmatprep.subr.mxu0 0.0
    %1050 = vmatpush2.msra.mxu0 0.0
    %1051 = vmatprep.subr.mxu0 0.0
    %1052 = vmatpush2.msra.mxu0 0.0
    %1053 = vmatprep.subr.mxu0 0.0
    %1054 = vmatpush2.msra.mxu0 0.0
    %1055 = vmatprep.subr.mxu0 0.0
    %1056 = vmatpush2.msra.mxu0 0.0
    %1057 = vmatprep.subr.mxu0 0.0
    %1058 = vmatpush2.msra.mxu0 0.0
    %1059 = vmatprep.mubr.f32.mxu0 0.0
    %1060 = vmatmul.mubr.f32.gmra.mxu0 %v990
    %v1061 = vpop.f32.mrf.mxu0
    %v1062 = vadd.f32 %v987, %v1061
    %v1063 = vpop.f32.mrf.mxu0
    %1064 = vmatprep.mubr.f32.mxu0 0.0
    %1065 = vmatmul.mubr.f32.gmra.mxu0 %v993
    %v1066 = vpop.f32.mrf.mxu0
    %v1067 = vadd.f32 %v987, %v1066
    %v1068 = vpop.f32.mrf.mxu0
    %1069 = vdwg.mxu0
    %v1070 = vtanh.pop %v1062
    %v1071 = vtanh.pop %v1067
    %v1072 = vmul.f32 %v1070, %v968
    %v1073 = vmul.f32 %v1071, %v970
    %v1074 = vmul.f32 %v1070, %v945
    %v1075 = vmul.f32 %v1071, %v950
    %1078 = vrot.lane.b32.xlu0 %v1074, 64
    %v1079 = vpop.permute.xlu0 %1078
    %1080 = vrot.lane.b32.xlu0 %v1075, 64
    %v1081 = vpop.permute.xlu0 %1080
    %v1084 = vadd.f32 %v1072, %v1079
    %v1085 = vadd.f32 %v1073, %v1081
    %1086 = vrot.lane.b32.xlu0 %v1074, 32
    %v1087 = vpop.permute.xlu0 %1086
    %1088 = vrot.lane.b32.xlu0 %v1075, 32
    %v1089 = vpop.permute.xlu0 %1088
    %v1092 = vadd.f32 %v1084, %v1087
    %v1093 = vadd.f32 %v1085, %v1089
    %v1094 = vmul.f32 %v1070, %v1070
    %v1095 = vmul.f32 %v1071, %v1071
    %v1096 = vsel %vm470, %v1094, 0.0
    %v1097 = vsel %vm470, %v1095, 0.0
    %v1098 = vadd.f32 %v1096, %v1097
    %1099 = vadd.xlane.f32.xlu0 %v1098
    %v1100 = vpop.xlane.xlu0 %1099
    %v1101 = vrot.slane %v1100, 4
    %v1102 = vadd.f32 %v1100, %v1101
    %v1103 = vrot.slane %v1102, 2
    %v1104 = vadd.f32 %v1102, %v1103
    %v1105 = vrot.slane %v1104, 1
    %v1106 = vadd.f32 %v1104, %v1105
    %s1107 = vtos %v1106
    %1110 = vrot.lane.b32.xlu0 %v1094, 96
    %v1111 = vpop.permute.xlu0 %1110
    %1112 = vrot.lane.b32.xlu0 %v1095, 96
    %v1113 = vpop.permute.xlu0 %1112
    %v1116 = vsel %vm470, %v1111, 0.0
    %v1117 = vsel %vm470, %v1113, 0.0
    %v1118 = vadd.f32 %v1116, %v1117
    %1119 = vadd.xlane.f32.xlu0 %v1118
    %v1120 = vpop.xlane.xlu0 %1119
    %v1121 = vrot.slane %v1120, 4
    %v1122 = vadd.f32 %v1120, %v1121
    %v1123 = vrot.slane %v1122, 2
    %v1124 = vadd.f32 %v1122, %v1123
    %v1125 = vrot.slane %v1124, 1
    %v1126 = vadd.f32 %v1124, %v1125
    %s1127 = vtos %v1126
    %1128 = vrot.lane.b32.xlu0 %v1094, 64
    %v1129 = vpop.permute.xlu0 %1128
    %1130 = vrot.lane.b32.xlu0 %v1095, 64
    %v1131 = vpop.permute.xlu0 %1130
    %v1134 = vsel %vm470, %v1129, 0.0
    %v1135 = vsel %vm470, %v1131, 0.0
    %v1136 = vadd.f32 %v1134, %v1135
    %1137 = vadd.xlane.f32.xlu0 %v1136
    %v1138 = vpop.xlane.xlu0 %1137
    %v1139 = vrot.slane %v1138, 4
    %v1140 = vadd.f32 %v1138, %v1139
    %v1141 = vrot.slane %v1140, 2
    %v1142 = vadd.f32 %v1140, %v1141
    %v1143 = vrot.slane %v1142, 1
    %v1144 = vadd.f32 %v1142, %v1143
    %s1145 = vtos %v1144
    %v1146 = vstv %s1145
    %v1147 = vrcp.pop %v1146
    %s1148 = vtos %v1147
    %s1149 = smul.f32 %s1107, %s1148
    %v1150 = vstv %s1145
    %v1151 = vrcp.pop %v1150
    %s1152 = vtos %v1151
    %s1153 = smul.f32 %s1127, %s1152
    %s1154 = smax.f32 %s1149, %s1153
    %s1155 = ssub.f32 %s1149, %s1154
    %v1156 = vstv %s1155
    %v1157 = vmul.f32 %v1156, 1.442695
    %v1158 = vpow.pop %v1157
    %s1159 = vtos %v1158
    %s1160 = ssub.f32 %s1153, %s1154
    %v1161 = vstv %s1160
    %v1162 = vmul.f32 %v1161, 1.442695
    %v1163 = vpow.pop %v1162
    %s1164 = vtos %v1163
    %s1165 = sadd.f32 %s1159, %s1164
    %v1166 = vstv %s1165
    %v1167 = vrcp.pop %v1166
    %s1168 = vtos %v1167
    %s1169 = smul.f32 %s1159, %s1168
    %v1170 = vstv %s1165
    %v1171 = vrcp.pop %v1170
    %s1172 = vtos %v1171
    %s1173 = smul.f32 %s1164, %s1172
    %v1174 = vmul.f32 %v589, %v945
    %v1175 = vmul.f32 %v592, %v950
    %1176 = vmatprep.subr.mxu0 0.0
    %1177 = vmatpush1.msra.mxu0 0.0
    %1178 = vmatprep.subr.mxu0 0.0
    %1179 = vmatpush1.msra.mxu0 0.0
    %1180 = vmatprep.subr.mxu0 0.0
    %1181 = vmatpush1.msra.mxu0 0.0
    %1182 = vmatprep.subr.mxu0 0.0
    %1183 = vmatpush1.msra.mxu0 0.0
    %1184 = vmatprep.subr.mxu0 0.0
    %1185 = vmatpush1.msra.mxu0 0.0
    %1186 = vmatprep.subr.mxu0 0.0
    %1187 = vmatpush1.msra.mxu0 0.0
    %1188 = vmatprep.subr.mxu0 0.0
    %1189 = vmatpush1.msra.mxu0 0.0
    %1190 = vmatprep.subr.mxu0 0.0
    %1191 = vmatpush1.msra.mxu0 0.0
    %1192 = vmatprep.subr.mxu0 0.0
    %1193 = vmatpush1.msra.mxu0 0.0
    %1194 = vmatprep.subr.mxu0 0.0
    %1195 = vmatpush1.msra.mxu0 0.0
    %1196 = vmatprep.subr.mxu0 0.0
    %1197 = vmatpush1.msra.mxu0 0.0
    %1198 = vmatprep.subr.mxu0 0.0
    %1199 = vmatpush1.msra.mxu0 0.0
    %1200 = vmatprep.subr.mxu0 0.0
    %1201 = vmatpush1.msra.mxu0 0.0
    %1202 = vmatprep.subr.mxu0 0.0
    %1203 = vmatpush1.msra.mxu0 0.0
    %1204 = vmatprep.subr.mxu0 0.0
    %1205 = vmatpush1.msra.mxu0 %v950
    %1206 = vmatprep.subr.mxu0 0.0
    %1207 = vmatpush1.msra.mxu0 %v945
    %1208 = vmatprep.subr.mxu0 0.0
    %1209 = vmatpush2.msra.mxu0 0.0
    %1210 = vmatprep.subr.mxu0 0.0
    %1211 = vmatpush2.msra.mxu0 0.0
    %1212 = vmatprep.subr.mxu0 0.0
    %1213 = vmatpush2.msra.mxu0 0.0
    %1214 = vmatprep.subr.mxu0 0.0
    %1215 = vmatpush2.msra.mxu0 0.0
    %1216 = vmatprep.subr.mxu0 0.0
    %1217 = vmatpush2.msra.mxu0 0.0
    %1218 = vmatprep.subr.mxu0 0.0
    %1219 = vmatpush2.msra.mxu0 0.0
    %1220 = vmatprep.subr.mxu0 0.0
    %1221 = vmatpush2.msra.mxu0 0.0
    %1222 = vmatprep.subr.mxu0 0.0
    %1223 = vmatpush2.msra.mxu0 0.0
    %1224 = vmatprep.subr.mxu0 0.0
    %1225 = vmatpush2.msra.mxu0 0.0
    %1226 = vmatprep.subr.mxu0 0.0
    %1227 = vmatpush2.msra.mxu0 0.0
    %1228 = vmatprep.subr.mxu0 0.0
    %1229 = vmatpush2.msra.mxu0 0.0
    %1230 = vmatprep.subr.mxu0 0.0
    %1231 = vmatpush2.msra.mxu0 0.0
    %1232 = vmatprep.subr.mxu0 0.0
    %1233 = vmatpush2.msra.mxu0 0.0
    %1234 = vmatprep.subr.mxu0 0.0
    %1235 = vmatpush2.msra.mxu0 0.0
    %1236 = vmatprep.subr.mxu0 0.0
    %1237 = vmatpush2.msra.mxu0 0.0
    %1238 = vmatprep.subr.mxu0 0.0
    %1239 = vmatpush2.msra.mxu0 0.0
    %1240 = vmatprep.mubr.f32.mxu0 0.0
    %1241 = vmatmul.mubr.f32.gmra.mxu0 %v616
    %v1242 = vpop.f32.mrf.mxu0
    %v1243 = vadd.f32 0.0, %v1242
    %v1244 = vpop.f32.mrf.mxu0
    %1245 = vmatprep.mubr.f32.mxu0 0.0
    %1246 = vmatmul.mubr.f32.gmra.mxu0 %v619
    %v1247 = vpop.f32.mrf.mxu0
    %v1248 = vadd.f32 0.0, %v1247
    %v1249 = vpop.f32.mrf.mxu0
    %1250 = vdwg.mxu0
    %v1251 = vsub.f32 %v1174, %v1243
    %v1252 = vsub.f32 %v1175, %v1248
    %v1253 = vmul.f32 %v945, %v1251
    %v1254 = vmul.f32 %v950, %v1252
    %v1255 = vsel %vm470, %v1253, 0.0
    %v1256 = vsel %vm470, %v1254, 0.0
    %v1257 = vadd.f32 %v1255, %v1256
    %1258 = vadd.xlane.f32.xlu0 %v1257
    %v1259 = vpop.xlane.xlu0 %1258
    %v1260 = vrot.slane %v1259, 4
    %v1261 = vadd.f32 %v1259, %v1260
    %v1262 = vrot.slane %v1261, 2
    %v1263 = vadd.f32 %v1261, %v1262
    %v1264 = vrot.slane %v1263, 1
    %v1265 = vadd.f32 %v1263, %v1264
    %s1266 = vtos %v1265
    %v1267 = vrcp.pop 256.0
    %s1268 = vtos %v1267
    %s1269 = smul.f32 %s1266, %s1268
    %1272 = vrot.lane.b32.xlu0 %v1253, 96
    %v1273 = vpop.permute.xlu0 %1272
    %1274 = vrot.lane.b32.xlu0 %v1254, 96
    %v1275 = vpop.permute.xlu0 %1274
    %v1278 = vsel %vm470, %v1273, 0.0
    %v1279 = vsel %vm470, %v1275, 0.0
    %v1280 = vadd.f32 %v1278, %v1279
    %1281 = vadd.xlane.f32.xlu0 %v1280
    %v1282 = vpop.xlane.xlu0 %1281
    %v1283 = vrot.slane %v1282, 4
    %v1284 = vadd.f32 %v1282, %v1283
    %v1285 = vrot.slane %v1284, 2
    %v1286 = vadd.f32 %v1284, %v1285
    %v1287 = vrot.slane %v1286, 1
    %v1288 = vadd.f32 %v1286, %v1287
    %s1289 = vtos %v1288
    %v1290 = vrcp.pop 256.0
    %s1291 = vtos %v1290
    %s1292 = smul.f32 %s1289, %s1291
    %s1293 = smul.f32 %s1269, 0.1
    %s1294 = smul.f32 %s614, 0.1
    %s1295 = sadd.f32 %s1293, %s1294
    %s1296 = smul.f32 %s1292, 0.1
    %s1297 = sadd.f32 %s1296, %s1294
    %s1298 = sadd.f32 %s459, 1e-05
    %v1299 = vstv %s1298
    %v1300 = vrcp.pop %v1299
    %s1301 = vtos %v1300
    %s1302 = smul.f32 %s1169, %s1295
    %s1303 = sadd.f32 %s1297, %s1301
    %s1304 = smul.f32 %s1173, %s1303
    %s1305 = sadd.f32 %s1302, %s1304
    %v1306 = vld [vmem:[#allocation8 + $0x420] sm:$0xff]
    %v1307 = vld [vmem:[#allocation8 + $0x428] sm:$0xff]
    %v1308 = vld [vmem:[#allocation8 + $0x430] sm:$0xff]
    %v1309 = vld [vmem:[#allocation8 + $0x438] sm:$0xff]
    %v1310 = vld [vmem:[#allocation8 + $0x440] sm:$0xff]
    %v1311 = vld [vmem:[#allocation8 + $0x448] sm:$0xff]
    %v1312 = vld [vmem:[#allocation8 + $0x450] sm:$0xff]
    %v1313 = vld [vmem:[#allocation8 + $0x458] sm:$0xff]
    %s1314 = scalar_lea.vmem [#allocation8], 1120
    %v1315 = vld [vmem:[%s1314] ss:$8 sm:$0x3]
    %v1317 = vlaneseq
    %v1318 = vshrl.u32 %v1317, 7
    %v1319 = vsub.s32 0, %v1318
    %v1320 = vrot.slane %v1315, %v1319
    %v1321 = vlaneseq
    %v1322 = vshrl.u32 %v1321, 7
    %v1323 = vsub.s32 1, %v1322
    %v1324 = vrot.slane %v1315, %v1323
    %1329 = vrot.lane.b32.xlu0 %v1092, 64
    %v1330 = vpop.permute.xlu0 %1329
    %1331 = vrot.lane.b32.xlu0 %v1093, 64
    %v1332 = vpop.permute.xlu0 %1331
    %v1333 = vsel %vm470, %v1330, 0
    %v1335 = vsel %vm470, %v1332, 0
    %1337 = vmatprep.subr.mxu0 0.0
    %1338 = vmatpush1.msra.mxu0 0.0
    %1339 = vmatprep.subr.mxu0 0.0
    %1340 = vmatpush1.msra.mxu0 0.0
    %1341 = vmatprep.subr.mxu0 0.0
    %1342 = vmatpush1.msra.mxu0 0.0
    %1343 = vmatprep.subr.mxu0 0.0
    %1344 = vmatpush1.msra.mxu0 0.0
    %1345 = vmatprep.subr.mxu0 0.0
    %1346 = vmatpush1.msra.mxu0 0.0
    %1347 = vmatprep.subr.mxu0 0.0
    %1348 = vmatpush1.msra.mxu0 0.0
    %1349 = vmatprep.subr.mxu0 0.0
    %1350 = vmatpush1.msra.mxu0 0.0
    %1351 = vmatprep.subr.mxu0 0.0
    %1352 = vmatpush1.msra.mxu0 0.0
    %1353 = vmatprep.subr.mxu0 0.0
    %1354 = vmatpush1.msra.mxu0 0.0
    %1355 = vmatprep.subr.mxu0 0.0
    %1356 = vmatpush1.msra.mxu0 0.0
    %1357 = vmatprep.subr.mxu0 0.0
    %1358 = vmatpush1.msra.mxu0 0.0
    %1359 = vmatprep.subr.mxu0 0.0
    %1360 = vmatpush1.msra.mxu0 0.0
    %1361 = vmatprep.subr.mxu0 %v1313
    %1362 = vmatpush1.msra.mxu0 %v1312
    %1363 = vmatprep.subr.mxu0 %v1311
    %1364 = vmatpush1.msra.mxu0 %v1310
    %1365 = vmatprep.subr.mxu0 %v1309
    %1366 = vmatpush1.msra.mxu0 %v1308
    %1367 = vmatprep.subr.mxu0 %v1307
    %1368 = vmatpush1.msra.mxu0 %v1306
    %1369 = vmatprep.subr.mxu0 0.0
    %1370 = vmatpush2.msra.mxu0 0.0
    %1371 = vmatprep.subr.mxu0 0.0
    %1372 = vmatpush2.msra.mxu0 0.0
    %1373 = vmatprep.subr.mxu0 0.0
    %1374 = vmatpush2.msra.mxu0 0.0
    %1375 = vmatprep.subr.mxu0 0.0
    %1376 = vmatpush2.msra.mxu0 0.0
    %1377 = vmatprep.subr.mxu0 0.0
    %1378 = vmatpush2.msra.mxu0 0.0
    %1379 = vmatprep.subr.mxu0 0.0
    %1380 = vmatpush2.msra.mxu0 0.0
    %1381 = vmatprep.subr.mxu0 0.0
    %1382 = vmatpush2.msra.mxu0 0.0
    %1383 = vmatprep.subr.mxu0 0.0
    %1384 = vmatpush2.msra.mxu0 0.0
    %1385 = vmatprep.subr.mxu0 0.0
    %1386 = vmatpush2.msra.mxu0 0.0
    %1387 = vmatprep.subr.mxu0 0.0
    %1388 = vmatpush2.msra.mxu0 0.0
    %1389 = vmatprep.subr.mxu0 0.0
    %1390 = vmatpush2.msra.mxu0 0.0
    %1391 = vmatprep.subr.mxu0 0.0
    %1392 = vmatpush2.msra.mxu0 0.0
    %1393 = vmatprep.subr.mxu0 0.0
    %1394 = vmatpush2.msra.mxu0 0.0
    %1395 = vmatprep.subr.mxu0 0.0
    %1396 = vmatpush2.msra.mxu0 0.0
    %1397 = vmatprep.subr.mxu0 0.0
    %1398 = vmatpush2.msra.mxu0 0.0
    %1399 = vmatprep.subr.mxu0 0.0
    %1400 = vmatpush2.msra.mxu0 0.0
    %1401 = vmatprep.mubr.f32.mxu0 0.0
    %1402 = vmatmul.mubr.f32.gmra.mxu0 %v1333
    %v1403 = vpop.f32.mrf.mxu0
    %v1404 = vadd.f32 %v1320, %v1403
    %v1405 = vpop.f32.mrf.mxu0
    %v1406 = vadd.f32 %v1324, %v1405
    %1407 = vmatprep.mubr.f32.mxu0 0.0
    %1408 = vmatmul.mubr.f32.gmra.mxu0 %v1335
    %v1409 = vpop.f32.mrf.mxu0
    %v1410 = vadd.f32 %v1320, %v1409
    %v1411 = vpop.f32.mrf.mxu0
    %v1412 = vadd.f32 %v1324, %v1411
    %1413 = vdwg.mxu0
    %v1414 = vmax.f32 %v1404, 0.0
    %v1415 = vmax.f32 %v1406, 0.0
    %v1416 = vmax.f32 %v1410, 0.0
    %v1417 = vmax.f32 %v1412, 0.0
    %v1418 = vld [vmem:[#allocation8 + $0x470] sm:$0xff]
    %v1419 = vld [vmem:[#allocation8 + $0x480] sm:$0xff]
    %v1420 = vld [vmem:[#allocation8 + $0x490] sm:$0xff]
    %v1421 = vld [vmem:[#allocation8 + $0x4a0] sm:$0xff]
    %v1422 = vld [vmem:[#allocation8 + $0x4b0] sm:$0xff]
    %v1423 = vld [vmem:[#allocation8 + $0x4c0] sm:$0xff]
    %v1424 = vld [vmem:[#allocation8 + $0x4d0] sm:$0xff]
    %v1425 = vld [vmem:[#allocation8 + $0x4e0] sm:$0xff]
    %v1426 = vld [vmem:[#allocation8 + $0x4f0] sm:$0xff]
    %v1427 = vld [vmem:[#allocation8 + $0x500] sm:$0xff]
    %v1428 = vld [vmem:[#allocation8 + $0x510] sm:$0xff]
    %v1429 = vld [vmem:[#allocation8 + $0x520] sm:$0xff]
    %v1430 = vld [vmem:[#allocation8 + $0x530] sm:$0xff]
    %v1431 = vld [vmem:[#allocation8 + $0x540] sm:$0xff]
    %v1432 = vld [vmem:[#allocation8 + $0x550] sm:$0xff]
    %v1433 = vld [vmem:[#allocation8 + $0x560] sm:$0xff]
    %v1434 = vld [vmem:[#allocation8 + $0x570] sm:$0xff]
    %v1435 = vld [vmem:[#allocation8 + $0x580] sm:$0xff]
    %v1436 = vld [vmem:[#allocation8 + $0x590] sm:$0xff]
    %v1437 = vld [vmem:[#allocation8 + $0x5a0] sm:$0xff]
    %v1438 = vld [vmem:[#allocation8 + $0x5b0] sm:$0xff]
    %v1439 = vld [vmem:[#allocation8 + $0x5c0] sm:$0xff]
    %v1440 = vld [vmem:[#allocation8 + $0x5d0] sm:$0xff]
    %v1441 = vld [vmem:[#allocation8 + $0x5e0] sm:$0xff]
    %v1442 = vld [vmem:[#allocation8 + $0x5f0] sm:$0xff]
    %v1443 = vld [vmem:[#allocation8 + $0x600] sm:$0xff]
    %v1444 = vld [vmem:[#allocation8 + $0x610] sm:$0xff]
    %v1445 = vld [vmem:[#allocation8 + $0x620] sm:$0xff]
    %v1446 = vld [vmem:[#allocation8 + $0x630] sm:$0xff]
    %v1447 = vld [vmem:[#allocation8 + $0x640] sm:$0xff]
    %v1448 = vld [vmem:[#allocation8 + $0x650] sm:$0xff]
    %v1449 = vld [vmem:[#allocation8 + $0x660] sm:$0xff]
    %v1450 = vld [vmem:[#allocation8 + $0x670] ss:$0 sm:$0xff]
    %1451 = vmatprep.subr.mxu0 0.0
    %1452 = vmatpush1.msra.mxu0 %v1433
    %1453 = vmatprep.subr.mxu0 0.0
    %1454 = vmatpush1.msra.mxu0 %v1432
    %1455 = vmatprep.subr.mxu0 0.0
    %1456 = vmatpush1.msra.mxu0 %v1431
    %1457 = vmatprep.subr.mxu0 0.0
    %1458 = vmatpush1.msra.mxu0 %v1430
    %1459 = vmatprep.subr.mxu0 0.0
    %1460 = vmatpush1.msra.mxu0 %v1429
    %1461 = vmatprep.subr.mxu0 0.0
    %1462 = vmatpush1.msra.mxu0 %v1428
    %1463 = vmatprep.subr.mxu0 0.0
    %1464 = vmatpush1.msra.mxu0 %v1427
    %1465 = vmatprep.subr.mxu0 0.0
    %1466 = vmatpush1.msra.mxu0 %v1426
    %1467 = vmatprep.subr.mxu0 0.0
    %1468 = vmatpush1.msra.mxu0 %v1425
    %1469 = vmatprep.subr.mxu0 0.0
    %1470 = vmatpush1.msra.mxu0 %v1424
    %1471 = vmatprep.subr.mxu0 0.0
    %1472 = vmatpush1.msra.mxu0 %v1423
    %1473 = vmatprep.subr.mxu0 0.0
    %1474 = vmatpush1.msra.mxu0 %v1422
    %1475 = vmatprep.subr.mxu0 0.0
    %1476 = vmatpush1.msra.mxu0 %v1421
    %1477 = vmatprep.subr.mxu0 0.0
    %1478 = vmatpush1.msra.mxu0 %v1420
    %1479 = vmatprep.subr.mxu0 0.0
    %1480 = vmatpush1.msra.mxu0 %v1419
    %1481 = vmatprep.subr.mxu0 0.0
    %1482 = vmatpush1.msra.mxu0 %v1418
    %1483 = vmatprep.subr.mxu0 0.0
    %1484 = vmatpush2.msra.mxu0 %v1449
    %1485 = vmatprep.subr.mxu0 0.0
    %1486 = vmatpush2.msra.mxu0 %v1448
    %1487 = vmatprep.subr.mxu0 0.0
    %1488 = vmatpush2.msra.mxu0 %v1447
    %1489 = vmatprep.subr.mxu0 0.0
    %1490 = vmatpush2.msra.mxu0 %v1446
    %1491 = vmatprep.subr.mxu0 0.0
    %1492 = vmatpush2.msra.mxu0 %v1445
    %1493 = vmatprep.subr.mxu0 0.0
    %1494 = vmatpush2.msra.mxu0 %v1444
    %1495 = vmatprep.subr.mxu0 0.0
    %1496 = vmatpush2.msra.mxu0 %v1443
    %1497 = vmatprep.subr.mxu0 0.0
    %1498 = vmatpush2.msra.mxu0 %v1442
    %1499 = vmatprep.subr.mxu0 0.0
    %1500 = vmatpush2.msra.mxu0 %v1441
    %1501 = vmatprep.subr.mxu0 0.0
    %1502 = vmatpush2.msra.mxu0 %v1440
    %1503 = vmatprep.subr.mxu0 0.0
    %1504 = vmatpush2.msra.mxu0 %v1439
    %1505 = vmatprep.subr.mxu0 0.0
    %1506 = vmatpush2.msra.mxu0 %v1438
    %1507 = vmatprep.subr.mxu0 0.0
    %1508 = vmatpush2.msra.mxu0 %v1437
    %1509 = vmatprep.subr.mxu0 0.0
    %1510 = vmatpush2.msra.mxu0 %v1436
    %1511 = vmatprep.subr.mxu0 0.0
    %1512 = vmatpush2.msra.mxu0 %v1435
    %1513 = vmatprep.subr.mxu0 0.0
    %1514 = vmatpush2.msra.mxu0 %v1434
    %1515 = vmatprep.mubr.f32.mxu0 %v1415
    %1516 = vmatmul.mubr.f32.gmra.mxu0 %v1414
    %v1517 = vpop.f32.mrf.mxu0
    %v1518 = vadd.f32 %v1450, %v1517
    %v1519 = vpop.f32.mrf.mxu0
    %1520 = vmatprep.mubr.f32.mxu0 %v1417
    %1521 = vmatmul.mubr.f32.gmra.mxu0 %v1416
    %v1522 = vpop.f32.mrf.mxu0
    %v1523 = vadd.f32 %v1450, %v1522
    %v1524 = vpop.f32.mrf.mxu0
    %1525 = vdwg.mxu0
    %1526 = vst.msk [vmem:[%s7] sm:$0xff] %vm85, %v1518
    %1527 = vst.msk [vmem:[%s7 + $0x8] sm:$0xff] %vm85, %v1523
    %s1528 = scalar_lea.smem [#allocation9], 0
    %1529 = sst [smem:[%s1528]] %s1305
    // Predicated region
    $region42: #{_forward_impl.1} parent=1 // pred_check
      _
    $region43: #{_forward_impl.1} parent=1 // pred_check_branch
      %1531 = sbr.rel (0) target = $region45
    $region44: #{_forward_impl.1} parent=1 // pred_region
      _
    $region45: #{_forward_impl.1} parent=1 // pred_fallthru
      _
    // Predicated region
    $region46: #{_forward_impl.1} parent=1 // pred_check
      _
    $region47: #{_forward_impl.1} parent=1 // pred_check_branch
      %1533 = sbr.rel (0) target = $region49
    $region48: #{_forward_impl.1} parent=1 // pred_region
      %s1535 = ssub.s32 16, 16
      %1536 = vsyncadd [#allocation4], %s1535
      %1539 = dma.smem_to_hbm [#allocation9], 16, %s8, [#allocation4]
    $region49: #{_forward_impl.1} parent=1 // pred_fallthru
      _
    // Predicated region
    $region50: #{_forward_impl.1} parent=1 // pred_check
      _
    $region51: #{_forward_impl.1} parent=1 // pred_check_branch
      %1541 = sbr.rel (0) target = $region53
    $region52: #{_forward_impl.1} parent=1 // pred_region
      _
    $region53: #{_forward_impl.1} parent=1 // pred_fallthru
      _
    // Predicated region
    $region54: #{_forward_impl.1} parent=1 // pred_check
      _
    $region55: #{_forward_impl.1} parent=1 // pred_check_branch
      %1543 = sbr.rel (0) target = $region57
    $region56: #{_forward_impl.1} parent=1 // pred_region
      %1544 = dma.done [#allocation4], 16
    $region57: #{_forward_impl.1} parent=1 // pred_fallthru
      _
    %1545 = sfence
    %1546 = vsyncpa [#allocation3], 1
    %1547 = vsyncpa [#allocation4], 1
    %1548 = vsyncpa [#allocation5], 1
    %1549 = vsyncpa [#allocation7], 1

</llo_original>
